<compile_context>
chip_gen: v6e
topology: v6e:2x2x1
jax: 0.10.0
libtpu: 0.0.40
codegen_flags: <defaults>
</compile_context>

<pallas_src>
from functools import partial

import jax
import jax.numpy as jnp
from jax.experimental import pallas as pl
from jax.experimental.pallas import tpu as pltpu


def group_attention_kernel(ctx_ref, eos_ref, gamma_ref, beta_ref,
                           wq_ref, bq_ref, wk_ref, bk_ref,
                           g_attn_ref, neibor_ref,
                           *, s_real, inv_scale, ln_eps):
    x = ctx_ref[0]                                   # (Sp, D) float32
    Sp, D = x.shape

    # ---- LayerNorm (unbiased std, eps added to std, then affine) ----
    mean = jnp.mean(x, axis=-1, keepdims=True)
    var = jnp.sum((x - mean) ** 2, axis=-1, keepdims=True) * (1.0 / (D - 1))
    inv_std = 1.0 / (jnp.sqrt(var) + ln_eps)          # (Sp,1): exact, one vreg
    xn = gamma_ref[...] * (x - mean) * inv_std + beta_ref[...]

    # ---- query / key projections (f32 MXU, f32 accumulation) ----
    q = jnp.dot(xn, wq_ref[...], preferred_element_type=jnp.float32) + bq_ref[...]
    k = jnp.dot(xn, wk_ref[...], preferred_element_type=jnp.float32) + bk_ref[...]

    # ---- scores = (Q K^T) / 256, contraction on feature dim (no K transpose) ----
    q = q * inv_scale                                  # fold the 1/256 scale into q
    scores = jax.lax.dot_general(q, k, (((1,), (1,)), ((), ())),
                                 preferred_element_type=jnp.float32)   # (Sp, Sp)

    # ---- structural masks from a single distance iota ----
    row = jax.lax.broadcasted_iota(jnp.int32, (Sp, Sp), 0)
    col = jax.lax.broadcasted_iota(jnp.int32, (Sp, Sp), 1)
    d = col - row
    eos = eos_ref[0]                                   # (Sp, 1) int32
    allowed = (eos != 0) & ((d == 1) | (d == -1))      # eos[i] & (super|sub diagonal)
    scores = jnp.where(allowed, scores, -1e9)
    if s_real < Sp:
        # Padded key columns must never receive probability mass (keeps the
        # real region identical to the unpadded reference, incl. all-masked
        # rows which softmax to uniform 1/S).
        scores = jnp.where(col < s_real, scores, -jnp.inf)

    # ---- masked softmax over the last dim ----
    m = jnp.max(scores, axis=-1, keepdims=True)
    p = jnp.exp(scores - m)
    attn = p * (1.0 / jnp.sum(p, axis=-1, keepdims=True))

    # neibor_attn = sqrt(attn * attn^T + 1e-9)   (exactly symmetric)
    neibor = jnp.sqrt(attn * attn.T + 1e-9)
    neibor_ref[0] = neibor

    # ---- group attention via rank-1 prefix-sum factorization ----
    # u[k] = log(neibor[k,k+1] + 1e-9),  c[m] = sum_{k<m} u[k]
    # reference:  g_upper[i,j] = exp(sum_{k=i}^{j-1} u[k]) = exp(c[j] - c[i]),  j > i
    sup_row = jnp.sum(jnp.where(d == 1, neibor, 0.0), axis=0, keepdims=True)   # (1,Sp): neibor[j-1,j]
    sub_col = jnp.sum(jnp.where(d == -1, neibor, 0.0), axis=1, keepdims=True)  # (Sp,1): neibor[i,i-1]
    j_row = jax.lax.broadcasted_iota(jnp.int32, (1, Sp), 1)
    i_col = jax.lax.broadcasted_iota(jnp.int32, (Sp, 1), 0)
    v_row = jnp.where(j_row >= 1, jnp.log(sup_row + 1e-9), 0.0)   # v[j] = u[j-1]
    v_col = jnp.where(i_col >= 1, jnp.log(sub_col + 1e-9), 0.0)   # same vector (symmetry)
    c_col = jnp.sum(jnp.where(d <= 0, v_row, 0.0), axis=1, keepdims=True)      # (Sp,1): c[i]
    c_row = jnp.sum(jnp.where(d >= 0, v_col, 0.0), axis=0, keepdims=True)      # (1,Sp): c[j]

    # g = g_upper + g_upper^T + neibor.masked_fill(offdiag, 1e-9)
    diff = c_row - c_col                               # diff[i,j] = c[j] - c[i]
    g_off = jnp.exp(jnp.where(d > 0, diff, -diff)) + 1e-9
    g_attn_ref[0] = jnp.where(d == 0, neibor, g_off)


def group_attention(context, eos_mask, prior, gamma, beta, wq, bq, wk, bk):
    """JAX wrapper. `prior` is accepted for signature fidelity but unused (as in
    the reference forward)."""
    del prior
    B, S, D = context.shape

    # Pad seq_len to a multiple of 128 so the (S,S) outputs store lane-dense
    # and the in-kernel transpose/reductions are tile-aligned.
    S_pad = ((S + 127) // 128) * 128
    pad = S_pad - S
    eos_i32 = eos_mask.astype(jnp.int32)
    if pad:
        context_p = jnp.pad(context, ((0, 0), (0, pad), (0, 0)))
        eos_p = jnp.pad(eos_i32, ((0, 0), (0, pad)))
    else:
        context_p, eos_p = context, eos_i32
    eos3 = eos_p.reshape(B, S_pad, 1)     # (Sp,1) layout -> cheap row-broadcast in-kernel

    kernel = partial(group_attention_kernel, s_real=S,
                     inv_scale=1.0 / 256.0, ln_eps=1e-6)

    # TODO(synk): for very small S and large B, a batch-block Bb>1 per grid step
    # (shared projection matmul) would further amortize the ~0.35us/step overhead.
    g_attn, neibor = pl.pallas_call(
        kernel,
        out_shape=(
            jax.ShapeDtypeStruct((B, S_pad, S_pad), jnp.float32),
            jax.ShapeDtypeStruct((B, S_pad, S_pad), jnp.float32),
        ),
        grid_spec=pltpu.PrefetchScalarGridSpec(
            num_scalar_prefetch=0,
            grid=(B,),
            in_specs=[
                pl.BlockSpec((1, S_pad, D), lambda b: (b, 0, 0)),   # context
                pl.BlockSpec((1, S_pad, 1), lambda b: (b, 0, 0)),   # eos_mask
                pl.BlockSpec((1, D), lambda b: (0, 0)),             # ln gamma
                pl.BlockSpec((1, D), lambda b: (0, 0)),             # ln beta
                pl.BlockSpec((D, D), lambda b: (0, 0)),             # W_query
                pl.BlockSpec((1, D), lambda b: (0, 0)),             # b_query
                pl.BlockSpec((D, D), lambda b: (0, 0)),             # W_key
                pl.BlockSpec((1, D), lambda b: (0, 0)),             # b_key
            ],
            out_specs=[
                pl.BlockSpec((1, S_pad, S_pad), lambda b: (b, 0, 0)),   # g_attn
                pl.BlockSpec((1, S_pad, S_pad), lambda b: (b, 0, 0)),   # neibor_attn
            ],
        ),
        compiler_params=pltpu.CompilerParams(dimension_semantics=("parallel",)),
    )(context_p, eos3, gamma, beta, wq, bq, wk, bk)

    if pad:
        g_attn = g_attn[:, :S, :S]
        neibor = neibor[:, :S, :S]
    return g_attn, neibor


if __name__ == "__main__":
    B, S, D = 2, 8, 32  # batch, seq_len, d_model (scores still scaled by 256.0 as in the module)

    key = jax.random.PRNGKey(0)
    k_ctx, k_eos, k_wq, k_wk = jax.random.split(key, 4)

    context = jax.random.normal(k_ctx, (B, S, D), dtype=jnp.float32)
    eos_mask = (jax.random.uniform(k_eos, (B, S)) > 0.2).astype(jnp.int32)
    prior = jnp.zeros((B, S, S), jnp.float32)  # unused by the reference forward

    # Deterministic parameter init (synthetic; shapes from the module __init__).
    gamma = jnp.ones((1, D), jnp.float32)       # LayerNorm a_2
    beta = jnp.zeros((1, D), jnp.float32)       # LayerNorm b_2
    wq = 0.02 * jax.random.normal(k_wq, (D, D), dtype=jnp.float32)
    bq = jnp.zeros((1, D), jnp.float32)
    wk = 0.02 * jax.random.normal(k_wk, (D, D), dtype=jnp.float32)
    bk = jnp.zeros((1, D), jnp.float32)

    g_attn, neibor_attn = group_attention(context, eos_mask, prior,
                                          gamma, beta, wq, bq, wk, bk)
    jax.block_until_ready((g_attn, neibor_attn))
    assert g_attn.shape == (B, S, S) and neibor_attn.shape == (B, S, S)
    print("KERNEL_OK")
</pallas_src>

<mosaic_0001>
module attributes {stable_mosaic.version = 11 : i64} {
  func.func @group_attention_kernel(%arg0: i32, %arg1: memref<1x128x32xf32, #tpu.memory_space<vmem>>, %arg2: memref<1x128x1xi32, #tpu.memory_space<vmem>>, %arg3: memref<1x32xf32, #tpu.memory_space<vmem>>, %arg4: memref<1x32xf32, #tpu.memory_space<vmem>>, %arg5: memref<32x32xf32, #tpu.memory_space<vmem>>, %arg6: memref<1x32xf32, #tpu.memory_space<vmem>>, %arg7: memref<32x32xf32, #tpu.memory_space<vmem>>, %arg8: memref<1x32xf32, #tpu.memory_space<vmem>>, %arg9: memref<1x128x128xf32, #tpu.memory_space<vmem>>, %arg10: memref<1x128x128xf32, #tpu.memory_space<vmem>>) attributes {dimension_semantics = [#tpu.dimension_semantics<parallel>], iteration_bounds = array<i64: 2>, scalar_prefetch = 0 : i64, scratch_operands = 0 : i64, tpu.core_type = #tpu.core_type<tc>, window_params = [{transform_indices = @transform_0, window_bounds = array<i64: 1, 128, 32>}, {transform_indices = @transform_1, window_bounds = array<i64: 1, 128, 1>}, {pipeline_mode = #tpu.pipeline_mode<synchronous>, transform_indices = @transform_2, window_bounds = array<i64: 1, 32>}, {pipeline_mode = #tpu.pipeline_mode<synchronous>, transform_indices = @transform_3, window_bounds = array<i64: 1, 32>}, {pipeline_mode = #tpu.pipeline_mode<synchronous>, transform_indices = @transform_4, window_bounds = array<i64: 32, 32>}, {pipeline_mode = #tpu.pipeline_mode<synchronous>, transform_indices = @transform_5, window_bounds = array<i64: 1, 32>}, {pipeline_mode = #tpu.pipeline_mode<synchronous>, transform_indices = @transform_6, window_bounds = array<i64: 32, 32>}, {pipeline_mode = #tpu.pipeline_mode<synchronous>, transform_indices = @transform_7, window_bounds = array<i64: 1, 32>}, {transform_indices = @transform_8, window_bounds = array<i64: 1, 128, 128>}, {transform_indices = @transform_9, window_bounds = array<i64: 1, 128, 128>}]} {
    %c0 = arith.constant 0 : index
    %c0_0 = arith.constant 0 : index
    %c0_1 = arith.constant 0 : index
    %0 = vector.load %arg1[%c0, %c0_0, %c0_1] : memref<1x128x32xf32, #tpu.memory_space<vmem>>, vector<1x128x32xf32>
    %1 = vector.shape_cast %0 : vector<1x128x32xf32> to vector<128x32xf32>
    %cst = arith.constant dense<0.000000e+00> : vector<128xf32>
    %2 = vector.multi_reduction <add>, %1, %cst [1] : vector<128x32xf32> to vector<128xf32>
    %3 = vector.shape_cast %2 : vector<128xf32> to vector<128x1xf32>
    %cst_2 = arith.constant 3.200000e+01 : f32
    %4 = vector.broadcast %cst_2 : f32 to vector<128x1xf32>
    %5 = arith.divf %3, %4 : vector<128x1xf32>
    %6 = vector.broadcast %5 : vector<128x1xf32> to vector<128x32xf32>
    %7 = arith.subf %1, %6 : vector<128x32xf32>
    %8 = arith.mulf %7, %7 : vector<128x32xf32>
    %cst_3 = arith.constant dense<0.000000e+00> : vector<128xf32>
    %9 = vector.multi_reduction <add>, %8, %cst_3 [1] : vector<128x32xf32> to vector<128xf32>
    %10 = vector.shape_cast %9 : vector<128xf32> to vector<128x1xf32>
    %cst_4 = arith.constant 0.0322580636 : f32
    %11 = vector.broadcast %cst_4 : f32 to vector<128x1xf32>
    %12 = arith.mulf %10, %11 : vector<128x1xf32>
    %13 = math.sqrt %12 : vector<128x1xf32>
    %cst_5 = arith.constant 9.99999997E-7 : f32
    %14 = vector.broadcast %cst_5 : f32 to vector<128x1xf32>
    %15 = arith.addf %13, %14 : vector<128x1xf32>
    %cst_6 = arith.constant 1.000000e+00 : f32
    %16 = vector.broadcast %cst_6 : f32 to vector<128x1xf32>
    %17 = arith.divf %16, %15 : vector<128x1xf32>
    %c0_7 = arith.constant 0 : index
    %c0_8 = arith.constant 0 : index
    %18 = vector.load %arg3[%c0_7, %c0_8] : memref<1x32xf32, #tpu.memory_space<vmem>>, vector<1x32xf32>
    %19 = vector.broadcast %5 : vector<128x1xf32> to vector<128x32xf32>
    %20 = arith.subf %1, %19 : vector<128x32xf32>
    %21 = vector.broadcast %18 : vector<1x32xf32> to vector<128x32xf32>
    %22 = arith.mulf %21, %20 : vector<128x32xf32>
    %23 = vector.broadcast %17 : vector<128x1xf32> to vector<128x32xf32>
    %24 = arith.mulf %22, %23 : vector<128x32xf32>
    %c0_9 = arith.constant 0 : index
    %c0_10 = arith.constant 0 : index
    %25 = vector.load %arg4[%c0_9, %c0_10] : memref<1x32xf32, #tpu.memory_space<vmem>>, vector<1x32xf32>
    %26 = vector.broadcast %25 : vector<1x32xf32> to vector<128x32xf32>
    %27 = arith.addf %24, %26 : vector<128x32xf32>
    %c0_11 = arith.constant 0 : index
    %c0_12 = arith.constant 0 : index
    %28 = vector.load %arg5[%c0_11, %c0_12] : memref<32x32xf32, #tpu.memory_space<vmem>>, vector<32x32xf32>
    %cst_13 = arith.constant dense<0.000000e+00> : vector<128x32xf32>
    %29 = tpu.matmul %27, %28, %cst_13 {dimension_numbers = #tpu.dot_dimension_numbers<[1], [0], [0], [1], [0, 0, 1, 1], [], []>} : vector<128x32xf32>, vector<32x32xf32>, vector<128x32xf32> -> vector<128x32xf32>
    %c0_14 = arith.constant 0 : index
    %c0_15 = arith.constant 0 : index
    %30 = vector.load %arg6[%c0_14, %c0_15] : memref<1x32xf32, #tpu.memory_space<vmem>>, vector<1x32xf32>
    %31 = vector.broadcast %30 : vector<1x32xf32> to vector<128x32xf32>
    %32 = arith.addf %29, %31 : vector<128x32xf32>
    %c0_16 = arith.constant 0 : index
    %c0_17 = arith.constant 0 : index
    %33 = vector.load %arg7[%c0_16, %c0_17] : memref<32x32xf32, #tpu.memory_space<vmem>>, vector<32x32xf32>
    %cst_18 = arith.constant dense<0.000000e+00> : vector<128x32xf32>
    %34 = tpu.matmul %27, %33, %cst_18 {dimension_numbers = #tpu.dot_dimension_numbers<[1], [0], [0], [1], [0, 0, 1, 1], [], []>} : vector<128x32xf32>, vector<32x32xf32>, vector<128x32xf32> -> vector<128x32xf32>
    %c0_19 = arith.constant 0 : index
    %c0_20 = arith.constant 0 : index
    %35 = vector.load %arg8[%c0_19, %c0_20] : memref<1x32xf32, #tpu.memory_space<vmem>>, vector<1x32xf32>
    %36 = vector.broadcast %35 : vector<1x32xf32> to vector<128x32xf32>
    %37 = arith.addf %34, %36 : vector<128x32xf32>
    %cst_21 = arith.constant 3.906250e-03 : f32
    %38 = vector.broadcast %cst_21 : f32 to vector<128x32xf32>
    %39 = arith.mulf %32, %38 : vector<128x32xf32>
    %cst_22 = arith.constant dense<0.000000e+00> : vector<128x128xf32>
    %40 = tpu.matmul %39, %37, %cst_22 {dimension_numbers = #tpu.dot_dimension_numbers<[1], [1], [0], [0], [0, 0, 1, 0], [], []>} : vector<128x32xf32>, vector<128x32xf32>, vector<128x128xf32> -> vector<128x128xf32>
    %41 = tpu.iota {dimensions = array<i32: 0>} : vector<128x128xi32>
    %42 = tpu.iota {dimensions = array<i32: 1>} : vector<128x128xi32>
    %43 = arith.subi %42, %41 : vector<128x128xi32>
    %c0_23 = arith.constant 0 : index
    %c0_24 = arith.constant 0 : index
    %c0_25 = arith.constant 0 : index
    %44 = vector.load %arg2[%c0_23, %c0_24, %c0_25] : memref<1x128x1xi32, #tpu.memory_space<vmem>>, vector<1x128x1xi32>
    %45 = vector.shape_cast %44 : vector<1x128x1xi32> to vector<128x1xi32>
    %c0_i32 = arith.constant 0 : i32
    %46 = vector.broadcast %c0_i32 : i32 to vector<128x1xi32>
    %47 = arith.cmpi ne, %45, %46 : vector<128x1xi32>
    %c1_i32 = arith.constant 1 : i32
    %48 = vector.broadcast %c1_i32 : i32 to vector<128x128xi32>
    %49 = arith.cmpi eq, %43, %48 : vector<128x128xi32>
    %c-1_i32 = arith.constant -1 : i32
    %50 = vector.broadcast %c-1_i32 : i32 to vector<128x128xi32>
    %51 = arith.cmpi eq, %43, %50 : vector<128x128xi32>
    %52 = arith.ori %49, %51 : vector<128x128xi1>
    %53 = vector.broadcast %47 : vector<128x1xi1> to vector<128x128xi1>
    %54 = arith.andi %53, %52 : vector<128x128xi1>
    %cst_26 = arith.constant -1.000000e+09 : f32
    %55 = vector.broadcast %cst_26 : f32 to vector<128x128xf32>
    %56 = arith.select %54, %40, %55 : vector<128x128xi1>, vector<128x128xf32>
    %c8_i32 = arith.constant 8 : i32
    %57 = vector.broadcast %c8_i32 : i32 to vector<128x128xi32>
    %58 = arith.cmpi slt, %42, %57 : vector<128x128xi32>
    %cst_27 = arith.constant 0xFF800000 : f32
    %59 = vector.broadcast %cst_27 : f32 to vector<128x128xf32>
    %60 = arith.select %58, %56, %59 : vector<128x128xi1>, vector<128x128xf32>
    %cst_28 = arith.constant dense<0xFF800000> : vector<128xf32>
    %61 = vector.multi_reduction <maximumf>, %60, %cst_28 [1] : vector<128x128xf32> to vector<128xf32>
    %62 = vector.shape_cast %61 : vector<128xf32> to vector<128x1xf32>
    %63 = vector.broadcast %62 : vector<128x1xf32> to vector<128x128xf32>
    %64 = arith.subf %60, %63 : vector<128x128xf32>
    %65 = math.exp %64 : vector<128x128xf32>
    %cst_29 = arith.constant dense<0.000000e+00> : vector<128xf32>
    %66 = vector.multi_reduction <add>, %65, %cst_29 [1] : vector<128x128xf32> to vector<128xf32>
    %67 = vector.shape_cast %66 : vector<128xf32> to vector<128x1xf32>
    %cst_30 = arith.constant 1.000000e+00 : f32
    %68 = vector.broadcast %cst_30 : f32 to vector<128x1xf32>
    %69 = arith.divf %68, %67 : vector<128x1xf32>
    %70 = vector.broadcast %69 : vector<128x1xf32> to vector<128x128xf32>
    %71 = arith.mulf %65, %70 : vector<128x128xf32>
    %72 = tpu.transpose %71, [1, 0] : vector<128x128xf32> -> vector<128x128xf32>
    %73 = arith.mulf %71, %72 : vector<128x128xf32>
    %cst_31 = arith.constant 9.99999971E-10 : f32
    %74 = vector.broadcast %cst_31 : f32 to vector<128x128xf32>
    %75 = arith.addf %73, %74 : vector<128x128xf32>
    %76 = math.sqrt %75 : vector<128x128xf32>
    %c0_32 = arith.constant 0 : index
    %c0_33 = arith.constant 0 : index
    %c0_34 = arith.constant 0 : index
    %77 = vector.load %arg10[%c0_32, %c0_33, %c0_34] : memref<1x128x128xf32, #tpu.memory_space<vmem>>, vector<1x128x128xf32>
    %78 = vector.shape_cast %77 : vector<1x128x128xf32> to vector<128x128xf32>
    %79 = vector.shape_cast %76 : vector<128x128xf32> to vector<1x128x128xf32>
    tpu.vector_store %arg10[%c0_32, %c0_33, %c0_34], %79 {strides = array<i32>} : memref<1x128x128xf32, #tpu.memory_space<vmem>>, vector<1x128x128xf32>,
    %c1_i32_35 = arith.constant 1 : i32
    %80 = vector.broadcast %c1_i32_35 : i32 to vector<128x128xi32>
    %81 = arith.cmpi eq, %43, %80 : vector<128x128xi32>
    %cst_36 = arith.constant 0.000000e+00 : f32
    %82 = vector.broadcast %cst_36 : f32 to vector<128x128xf32>
    %83 = arith.select %81, %76, %82 : vector<128x128xi1>, vector<128x128xf32>
    %cst_37 = arith.constant dense<0.000000e+00> : vector<128xf32>
    %84 = vector.multi_reduction <add>, %83, %cst_37 [0] : vector<128x128xf32> to vector<128xf32>
    %85 = vector.shape_cast %84 : vector<128xf32> to vector<1x128xf32>
    %c-1_i32_38 = arith.constant -1 : i32
    %86 = vector.broadcast %c-1_i32_38 : i32 to vector<128x128xi32>
    %87 = arith.cmpi eq, %43, %86 : vector<128x128xi32>
    %cst_39 = arith.constant 0.000000e+00 : f32
    %88 = vector.broadcast %cst_39 : f32 to vector<128x128xf32>
    %89 = arith.select %87, %76, %88 : vector<128x128xi1>, vector<128x128xf32>
    %cst_40 = arith.constant dense<0.000000e+00> : vector<128xf32>
    %90 = vector.multi_reduction <add>, %89, %cst_40 [1] : vector<128x128xf32> to vector<128xf32>
    %91 = vector.shape_cast %90 : vector<128xf32> to vector<128x1xf32>
    %92 = tpu.iota {dimensions = array<i32: 1>} : vector<1x128xi32>
    %93 = tpu.iota {dimensions = array<i32: 0>} : vector<128x1xi32>
    %c1_i32_41 = arith.constant 1 : i32
    %94 = vector.broadcast %c1_i32_41 : i32 to vector<1x128xi32>
    %95 = arith.cmpi sge, %92, %94 : vector<1x128xi32>
    %cst_42 = arith.constant 9.99999971E-10 : f32
    %96 = vector.broadcast %cst_42 : f32 to vector<1x128xf32>
    %97 = arith.addf %85, %96 : vector<1x128xf32>
    %98 = math.log %97 : vector<1x128xf32>
    %cst_43 = arith.constant 0.000000e+00 : f32
    %99 = vector.broadcast %cst_43 : f32 to vector<1x128xf32>
    %100 = arith.select %95, %98, %99 : vector<1x128xi1>, vector<1x128xf32>
    %c1_i32_44 = arith.constant 1 : i32
    %101 = vector.broadcast %c1_i32_44 : i32 to vector<128x1xi32>
    %102 = arith.cmpi sge, %93, %101 : vector<128x1xi32>
    %cst_45 = arith.constant 9.99999971E-10 : f32
    %103 = vector.broadcast %cst_45 : f32 to vector<128x1xf32>
    %104 = arith.addf %91, %103 : vector<128x1xf32>
    %105 = math.log %104 : vector<128x1xf32>
    %cst_46 = arith.constant 0.000000e+00 : f32
    %106 = vector.broadcast %cst_46 : f32 to vector<128x1xf32>
    %107 = arith.select %102, %105, %106 : vector<128x1xi1>, vector<128x1xf32>
    %c0_i32_47 = arith.constant 0 : i32
    %108 = vector.broadcast %c0_i32_47 : i32 to vector<128x128xi32>
    %109 = arith.cmpi sle, %43, %108 : vector<128x128xi32>
    %cst_48 = arith.constant 0.000000e+00 : f32
    %110 = vector.shape_cast %100 : vector<1x128xf32> to vector<1x128xf32>
    %111 = vector.broadcast %110 : vector<1x128xf32> to vector<128x128xf32>
    %112 = vector.broadcast %cst_48 : f32 to vector<128x128xf32>
    %113 = arith.select %109, %111, %112 : vector<128x128xi1>, vector<128x128xf32>
    %cst_49 = arith.constant dense<0.000000e+00> : vector<128xf32>
    %114 = vector.multi_reduction <add>, %113, %cst_49 [1] : vector<128x128xf32> to vector<128xf32>
    %115 = vector.shape_cast %114 : vector<128xf32> to vector<128x1xf32>
    %c0_i32_50 = arith.constant 0 : i32
    %116 = vector.broadcast %c0_i32_50 : i32 to vector<128x128xi32>
    %117 = arith.cmpi sge, %43, %116 : vector<128x128xi32>
    %cst_51 = arith.constant 0.000000e+00 : f32
    %118 = vector.shape_cast %107 : vector<128x1xf32> to vector<128x1xf32>
    %119 = vector.broadcast %118 : vector<128x1xf32> to vector<128x128xf32>
    %120 = vector.broadcast %cst_51 : f32 to vector<128x128xf32>
    %121 = arith.select %117, %119, %120 : vector<128x128xi1>, vector<128x128xf32>
    %cst_52 = arith.constant dense<0.000000e+00> : vector<128xf32>
    %122 = vector.multi_reduction <add>, %121, %cst_52 [0] : vector<128x128xf32> to vector<128xf32>
    %123 = vector.shape_cast %122 : vector<128xf32> to vector<1x128xf32>
    %124 = vector.broadcast %123 : vector<1x128xf32> to vector<128x128xf32>
    %125 = vector.broadcast %115 : vector<128x1xf32> to vector<128x128xf32>
    %126 = arith.subf %124, %125 : vector<128x128xf32>
    %c0_i32_53 = arith.constant 0 : i32
    %127 = vector.broadcast %c0_i32_53 : i32 to vector<128x128xi32>
    %128 = arith.cmpi sgt, %43, %127 : vector<128x128xi32>
    %cst_54 = arith.constant 0.000000e+00 : f32
    %129 = vector.broadcast %cst_54 : f32 to vector<128x128xf32>
    %130 = arith.subf %129, %126 : vector<128x128xf32>
    %131 = arith.select %128, %126, %130 : vector<128x128xi1>, vector<128x128xf32>
    %132 = math.exp %131 : vector<128x128xf32>
    %cst_55 = arith.constant 9.99999971E-10 : f32
    %133 = vector.broadcast %cst_55 : f32 to vector<128x128xf32>
    %134 = arith.addf %132, %133 : vector<128x128xf32>
    %c0_i32_56 = arith.constant 0 : i32
    %135 = vector.broadcast %c0_i32_56 : i32 to vector<128x128xi32>
    %136 = arith.cmpi eq, %43, %135 : vector<128x128xi32>
    %137 = arith.select %136, %76, %134 : vector<128x128xi1>, vector<128x128xf32>
    %c0_57 = arith.constant 0 : index
    %c0_58 = arith.constant 0 : index
    %c0_59 = arith.constant 0 : index
    %138 = vector.load %arg9[%c0_57, %c0_58, %c0_59] : memref<1x128x128xf32, #tpu.memory_space<vmem>>, vector<1x128x128xf32>
    %139 = vector.shape_cast %138 : vector<1x128x128xf32> to vector<128x128xf32>
    %140 = vector.shape_cast %137 : vector<128x128xf32> to vector<1x128x128xf32>
    tpu.vector_store %arg9[%c0_57, %c0_58, %c0_59], %140 {strides = array<i32>} : memref<1x128x128xf32, #tpu.memory_space<vmem>>, vector<1x128x128xf32>,
    return
  }
  func.func @transform_0(%arg0: i32) -> (i32, i32, i32) {
    %c0_i32 = arith.constant 0 : i32
    %c0_i32_0 = arith.constant 0 : i32
    %c0_i32_1 = arith.constant 0 : i32
    return %arg0, %c0_i32, %c0_i32_0 : i32, i32, i32
  }
  func.func @transform_1(%arg0: i32) -> (i32, i32, i32) {
    %c0_i32 = arith.constant 0 : i32
    %c0_i32_0 = arith.constant 0 : i32
    %c0_i32_1 = arith.constant 0 : i32
    return %arg0, %c0_i32, %c0_i32_0 : i32, i32, i32
  }
  func.func @transform_2(%arg0: i32) -> (i32, i32) {
    %c0_i32 = arith.constant 0 : i32
    %c0_i32_0 = arith.constant 0 : i32
    %c0_i32_1 = arith.constant 0 : i32
    return %c0_i32, %c0_i32_0 : i32, i32
  }
  func.func @transform_3(%arg0: i32) -> (i32, i32) {
    %c0_i32 = arith.constant 0 : i32
    %c0_i32_0 = arith.constant 0 : i32
    %c0_i32_1 = arith.constant 0 : i32
    return %c0_i32, %c0_i32_0 : i32, i32
  }
  func.func @transform_4(%arg0: i32) -> (i32, i32) {
    %c0_i32 = arith.constant 0 : i32
    %c0_i32_0 = arith.constant 0 : i32
    %c0_i32_1 = arith.constant 0 : i32
    return %c0_i32, %c0_i32_0 : i32, i32
  }
  func.func @transform_5(%arg0: i32) -> (i32, i32) {
    %c0_i32 = arith.constant 0 : i32
    %c0_i32_0 = arith.constant 0 : i32
    %c0_i32_1 = arith.constant 0 : i32
    return %c0_i32, %c0_i32_0 : i32, i32
  }
  func.func @transform_6(%arg0: i32) -> (i32, i32) {
    %c0_i32 = arith.constant 0 : i32
    %c0_i32_0 = arith.constant 0 : i32
    %c0_i32_1 = arith.constant 0 : i32
    return %c0_i32, %c0_i32_0 : i32, i32
  }
  func.func @transform_7(%arg0: i32) -> (i32, i32) {
    %c0_i32 = arith.constant 0 : i32
    %c0_i32_0 = arith.constant 0 : i32
    %c0_i32_1 = arith.constant 0 : i32
    return %c0_i32, %c0_i32_0 : i32, i32
  }
  func.func @transform_8(%arg0: i32) -> (i32, i32, i32) {
    %c0_i32 = arith.constant 0 : i32
    %c0_i32_0 = arith.constant 0 : i32
    %c0_i32_1 = arith.constant 0 : i32
    return %arg0, %c0_i32, %c0_i32_0 : i32, i32, i32
  }
  func.func @transform_9(%arg0: i32) -> (i32, i32, i32) {
    %c0_i32 = arith.constant 0 : i32
    %c0_i32_0 = arith.constant 0 : i32
    %c0_i32_1 = arith.constant 0 : i32
    return %arg0, %c0_i32, %c0_i32_0 : i32, i32, i32
  }
}

</mosaic_0001>

<llo_original>
// kernel: tpu_custom_call.1
$region0: #{tpu_custom_call.1}
  #allocation0 [shape = 'u32[]', space=smem, size = 0x4, offset = 0x4, fixed_abs, tag = 'smem constant byte address 0x4 - core index']
  #allocation1 [shape = 'u32[144,128]{1,0:T(1,128)}', space=vmem, size = 0x12000, scoped, tag = 'internal scratch']
  %s0 = inlined_call_operand.vmem [shape: f32[2,128,32], index: 0, kind: input, shape index: {}]
  %s1 = inlined_call_operand.vmem [shape: s32[2,128,1], index: 1, kind: input, shape index: {}]
  %s2 = inlined_call_operand.vmem [shape: f32[1,32], index: 2, kind: input, shape index: {}]
  %s3 = inlined_call_operand.vmem [shape: f32[1,32], index: 3, kind: input, shape index: {}]
  %s4 = inlined_call_operand.vmem [shape: f32[32,32], index: 4, kind: input, shape index: {}]
  %s5 = inlined_call_operand.vmem [shape: f32[1,32], index: 5, kind: input, shape index: {}]
  %s6 = inlined_call_operand.vmem [shape: f32[32,32], index: 6, kind: input, shape index: {}]
  %s7 = inlined_call_operand.vmem [shape: f32[1,32], index: 7, kind: input, shape index: {}]
  %s8 = inlined_call_operand.hbm [shape: f32[2,128,128], index: 8, kind: output, shape index: {0}]
  %s9 = inlined_call_operand.hbm [shape: f32[2,128,128], index: 9, kind: output, shape index: {1}]
  %10 = xla_tuple %s8, %s9
  %s11 = sld [smem:[#allocation0]]
  $region73: #{tpu_custom_call.1} parent=0
    _
  %s13 = ssub.s32 1, %s11
  %s14 = scalar_select 0, %s13, %s11
  $region1: #{tpu_custom_call.1} parent=0
    #allocation2 [shape = 'u8[131072]{0}', space=vmem, size = 0x20000, scoped, tag = 'output window, operand 0']
    #allocation3 [shape = 's32[2]{0}', space=sflag, size = 0x8, scoped, tag = 'scoped memory for tpu_custom_call.1']
    #allocation4 [shape = 'u8[131072]{0}', space=vmem, size = 0x20000, scoped, tag = 'output window, operand 1']
    #allocation5 [shape = 's32[2]{0}', space=sflag, size = 0x8, scoped, tag = 'scoped memory for tpu_custom_call.1']
    %15 = vsyncpa [#allocation3], 0
    %s16 = scalar_lea.sflag [#allocation3], 1
    %17 = vsyncpa %s16, 0
    %18 = vsyncpa [#allocation5], 0
    %s19 = scalar_lea.sflag [#allocation5], 1
    %20 = vsyncpa %s19, 0
    loop: start=0, step=1, limit=4
    $region2: #{tpu_custom_call.1} parent=1 // loop_pre_header
      _
    $region3: #{tpu_custom_call.1} parent=1 // loop_header
      %s22 = sphi 0, %s26
      %p23 = scmp.ge.s32.totalorder %s22, 4
      %s32 = sphi 0, %s34
      %s35 = sphi 0, %s32
      %s36 = sphi 0, %s35
      %s52 = sphi 0, %s36
      %s58 = sphi 0, %s60
      %s61 = sphi 0, %s58
      %s62 = sphi 0, %s61
      %s78 = sphi 0, %s62
      %s82 = sphi 0, %s82
      %s84 = sphi 0, %s82
      %s85 = sphi 0, %s84
      %s99 = sphi 0, %s85
      %s103 = sphi 0, %s103
      %s105 = sphi 0, %s103
      %s106 = sphi 0, %s105
      %s120 = sphi 0, %s106
      %s124 = sphi 0, %s124
      %s126 = sphi 0, %s124
      %s127 = sphi 0, %s126
      %s141 = sphi 0, %s127
      %s145 = sphi 0, %s145
      %s147 = sphi 0, %s145
      %s148 = sphi 0, %s147
      %s162 = sphi 0, %s148
      %s166 = sphi 0, %s166
      %s168 = sphi 0, %s166
      %s169 = sphi 0, %s168
      %s183 = sphi 0, %s169
      %s187 = sphi 0, %s187
      %s189 = sphi 0, %s187
      %s190 = sphi 0, %s189
      %s204 = sphi 0, %s190
      %s210 = sphi 0, %s212
      %s213 = sphi 0, %s210
      %s214 = sphi 0, %s213
      %s230 = sphi 0, %s214
      %s236 = sphi 0, %s238
      %s239 = sphi 0, %s236
      %s240 = sphi 0, %s239
      %s256 = sphi 0, %s240
    $region4: #{tpu_custom_call.1} parent=1 // loop_header_branch
      %25 = sbr.rel (%p23) target = $region8
    $region5: #{tpu_custom_call.1} parent=1 // loop_body
      %s27 = ssub.s32 %s22, 1
      %s28 = ssub.s32 %s22, 2
      %s29 = sadd.s32 %s22, 1
      %s30 = ssub.s32 %s22, %s29
      %p31 = scmp.eq.s32.totalorder %s30, 0
      %s33 = sadd.s32 %s32, 1
      %s34 = scalar_select %p31, %s32, %s33
      %p37 = pneg %p31
      %p38 = scmp.eq.s32.totalorder %s22, 1
      %p39 = por %p37, %p38
      %p40 = scmp.ne.s32.totalorder %s32, %s35
      %p41 = scmp.eq.s32.totalorder %s22, 0
      %p42 = por %p40, %p41
      %p43 = scmp.ne.s32.totalorder %s32, %s35
      %p44 = scmp.eq.s32.totalorder %s27, 1
      %p45 = por %p43, %p44
      %p46 = scmp.ne.s32.totalorder %s35, %s36
      %p47 = scmp.eq.s32.totalorder %s27, 0
      %p48 = por %p46, %p47
      %p49 = scmp.ne.s32.totalorder %s35, %s36
      %p50 = scmp.eq.s32.totalorder %s28, 1
      %p51 = por %p49, %p50
      %p53 = scmp.ne.s32.totalorder %s36, %s52
      %p54 = scmp.eq.s32.totalorder %s28, 0
      %p55 = por %p53, %p54
      %s56 = ssub.s32 %s22, %s29
      %p57 = scmp.eq.s32.totalorder %s56, 0
      %s59 = sadd.s32 %s58, 1
      %s60 = scalar_select %p57, %s58, %s59
      %p63 = pneg %p57
      %p64 = scmp.eq.s32.totalorder %s22, 1
      %p65 = por %p63, %p64
      %p66 = scmp.ne.s32.totalorder %s58, %s61
      %p67 = scmp.eq.s32.totalorder %s22, 0
      %p68 = por %p66, %p67
      %p69 = scmp.ne.s32.totalorder %s58, %s61
      %p70 = scmp.eq.s32.totalorder %s27, 1
      %p71 = por %p69, %p70
      %p72 = scmp.ne.s32.totalorder %s61, %s62
      %p73 = scmp.eq.s32.totalorder %s27, 0
      %p74 = por %p72, %p73
      %p75 = scmp.ne.s32.totalorder %s61, %s62
      %p76 = scmp.eq.s32.totalorder %s28, 1
      %p77 = por %p75, %p76
      %p79 = scmp.ne.s32.totalorder %s62, %s78
      %p80 = scmp.eq.s32.totalorder %s28, 0
      %p81 = por %p79, %p80
      %s83 = sadd.s32 %s82, 1
      %p86 = scmp.eq.s32.totalorder %s22, 1
      %p87 = scmp.ne.s32.totalorder %s82, %s84
      %p88 = scmp.eq.s32.totalorder %s22, 0
      %p89 = por %p87, %p88
      %p90 = scmp.ne.s32.totalorder %s82, %s84
      %p91 = scmp.eq.s32.totalorder %s27, 1
      %p92 = por %p90, %p91
      %p93 = scmp.ne.s32.totalorder %s84, %s85
      %p94 = scmp.eq.s32.totalorder %s27, 0
      %p95 = por %p93, %p94
      %p96 = scmp.ne.s32.totalorder %s84, %s85
      %p97 = scmp.eq.s32.totalorder %s28, 1
      %p98 = por %p96, %p97
      %p100 = scmp.ne.s32.totalorder %s85, %s99
      %p101 = scmp.eq.s32.totalorder %s28, 0
      %p102 = por %p100, %p101
      %s104 = sadd.s32 %s103, 1
      %p107 = scmp.eq.s32.totalorder %s22, 1
      %p108 = scmp.ne.s32.totalorder %s103, %s105
      %p109 = scmp.eq.s32.totalorder %s22, 0
      %p110 = por %p108, %p109
      %p111 = scmp.ne.s32.totalorder %s103, %s105
      %p112 = scmp.eq.s32.totalorder %s27, 1
      %p113 = por %p111, %p112
      %p114 = scmp.ne.s32.totalorder %s105, %s106
      %p115 = scmp.eq.s32.totalorder %s27, 0
      %p116 = por %p114, %p115
      %p117 = scmp.ne.s32.totalorder %s105, %s106
      %p118 = scmp.eq.s32.totalorder %s28, 1
      %p119 = por %p117, %p118
      %p121 = scmp.ne.s32.totalorder %s106, %s120
      %p122 = scmp.eq.s32.totalorder %s28, 0
      %p123 = por %p121, %p122
      %s125 = sadd.s32 %s124, 1
      %p128 = scmp.eq.s32.totalorder %s22, 1
      %p129 = scmp.ne.s32.totalorder %s124, %s126
      %p130 = scmp.eq.s32.totalorder %s22, 0
      %p131 = por %p129, %p130
      %p132 = scmp.ne.s32.totalorder %s124, %s126
      %p133 = scmp.eq.s32.totalorder %s27, 1
      %p134 = por %p132, %p133
      %p135 = scmp.ne.s32.totalorder %s126, %s127
      %p136 = scmp.eq.s32.totalorder %s27, 0
      %p137 = por %p135, %p136
      %p138 = scmp.ne.s32.totalorder %s126, %s127
      %p139 = scmp.eq.s32.totalorder %s28, 1
      %p140 = por %p138, %p139
      %p142 = scmp.ne.s32.totalorder %s127, %s141
      %p143 = scmp.eq.s32.totalorder %s28, 0
      %p144 = por %p142, %p143
      %s146 = sadd.s32 %s145, 1
      %p149 = scmp.eq.s32.totalorder %s22, 1
      %p150 = scmp.ne.s32.totalorder %s145, %s147
      %p151 = scmp.eq.s32.totalorder %s22, 0
      %p152 = por %p150, %p151
      %p153 = scmp.ne.s32.totalorder %s145, %s147
      %p154 = scmp.eq.s32.totalorder %s27, 1
      %p155 = por %p153, %p154
      %p156 = scmp.ne.s32.totalorder %s147, %s148
      %p157 = scmp.eq.s32.totalorder %s27, 0
      %p158 = por %p156, %p157
      %p159 = scmp.ne.s32.totalorder %s147, %s148
      %p160 = scmp.eq.s32.totalorder %s28, 1
      %p161 = por %p159, %p160
      %p163 = scmp.ne.s32.totalorder %s148, %s162
      %p164 = scmp.eq.s32.totalorder %s28, 0
      %p165 = por %p163, %p164
      %s167 = sadd.s32 %s166, 1
      %p170 = scmp.eq.s32.totalorder %s22, 1
      %p171 = scmp.ne.s32.totalorder %s166, %s168
      %p172 = scmp.eq.s32.totalorder %s22, 0
      %p173 = por %p171, %p172
      %p174 = scmp.ne.s32.totalorder %s166, %s168
      %p175 = scmp.eq.s32.totalorder %s27, 1
      %p176 = por %p174, %p175
      %p177 = scmp.ne.s32.totalorder %s168, %s169
      %p178 = scmp.eq.s32.totalorder %s27, 0
      %p179 = por %p177, %p178
      %p180 = scmp.ne.s32.totalorder %s168, %s169
      %p181 = scmp.eq.s32.totalorder %s28, 1
      %p182 = por %p180, %p181
      %p184 = scmp.ne.s32.totalorder %s169, %s183
      %p185 = scmp.eq.s32.totalorder %s28, 0
      %p186 = por %p184, %p185
      %s188 = sadd.s32 %s187, 1
      %p191 = scmp.eq.s32.totalorder %s22, 1
      %p192 = scmp.ne.s32.totalorder %s187, %s189
      %p193 = scmp.eq.s32.totalorder %s22, 0
      %p194 = por %p192, %p193
      %p195 = scmp.ne.s32.totalorder %s187, %s189
      %p196 = scmp.eq.s32.totalorder %s27, 1
      %p197 = por %p195, %p196
      %p198 = scmp.ne.s32.totalorder %s189, %s190
      %p199 = scmp.eq.s32.totalorder %s27, 0
      %p200 = por %p198, %p199
      %p201 = scmp.ne.s32.totalorder %s189, %s190
      %p202 = scmp.eq.s32.totalorder %s28, 1
      %p203 = por %p201, %p202
      %p205 = scmp.ne.s32.totalorder %s190, %s204
      %p206 = scmp.eq.s32.totalorder %s28, 0
      %p207 = por %p205, %p206
      %s208 = ssub.s32 %s22, %s29
      %p209 = scmp.eq.s32.totalorder %s208, 0
      %s211 = sadd.s32 %s210, 1
      %s212 = scalar_select %p209, %s210, %s211
      %p215 = pneg %p209
      %p216 = scmp.eq.s32.totalorder %s22, 1
      %p217 = por %p215, %p216
      %p218 = scmp.ne.s32.totalorder %s210, %s213
      %p219 = scmp.eq.s32.totalorder %s22, 0
      %p220 = por %p218, %p219
      %p221 = scmp.ne.s32.totalorder %s210, %s213
      %p222 = scmp.eq.s32.totalorder %s27, 1
      %p223 = por %p221, %p222
      %p224 = scmp.ne.s32.totalorder %s213, %s214
      %p225 = scmp.eq.s32.totalorder %s27, 0
      %p226 = por %p224, %p225
      %p227 = scmp.ne.s32.totalorder %s213, %s214
      %p228 = scmp.eq.s32.totalorder %s28, 1
      %p229 = por %p227, %p228
      %p231 = scmp.ne.s32.totalorder %s214, %s230
      %p232 = scmp.eq.s32.totalorder %s28, 0
      %p233 = por %p231, %p232
      %s234 = ssub.s32 %s22, %s29
      %p235 = scmp.eq.s32.totalorder %s234, 0
      %s237 = sadd.s32 %s236, 1
      %s238 = scalar_select %p235, %s236, %s237
      %p241 = pneg %p235
      %p242 = scmp.eq.s32.totalorder %s22, 1
      %p243 = por %p241, %p242
      %p244 = scmp.ne.s32.totalorder %s236, %s239
      %p245 = scmp.eq.s32.totalorder %s22, 0
      %p246 = por %p244, %p245
      %p247 = scmp.ne.s32.totalorder %s236, %s239
      %p248 = scmp.eq.s32.totalorder %s27, 1
      %p249 = por %p247, %p248
      %p250 = scmp.ne.s32.totalorder %s239, %s240
      %p251 = scmp.eq.s32.totalorder %s27, 0
      %p252 = por %p250, %p251
      %p253 = scmp.ne.s32.totalorder %s239, %s240
      %p254 = scmp.eq.s32.totalorder %s28, 1
      %p255 = por %p253, %p254
      %p257 = scmp.ne.s32.totalorder %s240, %s256
      %p258 = scmp.eq.s32.totalorder %s28, 0
      %p259 = por %p257, %p258
      %p260 = scmp.le.s32.totalorder 1, %s22
      %p261 = scmp.lt.s32.totalorder %s22, 3
      %p262 = pnand %p260, %p261
      %p263 = pneg %p262
      // Predicated region
      $region9: #{tpu_custom_call.1} parent=5 // pred_check
        _
      $region10: #{tpu_custom_call.1} parent=5 // pred_check_branch
        %265 = sbr.rel (%p262) target = $region12
      $region11: #{tpu_custom_call.1} parent=5 // pred_region
        %s266 = ssub.s32 %s22, 1
        // Predicated region
        $region13: #{tpu_custom_call.1} parent=11 // pred_check
          %p267 = pneg %p95
        $region14: #{tpu_custom_call.1} parent=11 // pred_check_branch
          %269 = sbr.rel (%p267) target = $region16
        $region15: #{tpu_custom_call.1} parent=11 // pred_region
          _
        $region16: #{tpu_custom_call.1} parent=11 // pred_fallthru
          _
        // Predicated region
        $region17: #{tpu_custom_call.1} parent=11 // pred_check
          %p270 = pneg %p116
        $region18: #{tpu_custom_call.1} parent=11 // pred_check_branch
          %272 = sbr.rel (%p270) target = $region20
        $region19: #{tpu_custom_call.1} parent=11 // pred_region
          _
        $region20: #{tpu_custom_call.1} parent=11 // pred_fallthru
          _
        // Predicated region
        $region21: #{tpu_custom_call.1} parent=11 // pred_check
          %p273 = pneg %p137
        $region22: #{tpu_custom_call.1} parent=11 // pred_check_branch
          %275 = sbr.rel (%p273) target = $region24
        $region23: #{tpu_custom_call.1} parent=11 // pred_region
          _
        $region24: #{tpu_custom_call.1} parent=11 // pred_fallthru
          _
        // Predicated region
        $region25: #{tpu_custom_call.1} parent=11 // pred_check
          %p276 = pneg %p158
        $region26: #{tpu_custom_call.1} parent=11 // pred_check_branch
          %278 = sbr.rel (%p276) target = $region28
        $region27: #{tpu_custom_call.1} parent=11 // pred_region
          _
        $region28: #{tpu_custom_call.1} parent=11 // pred_fallthru
          _
        // Predicated region
        $region29: #{tpu_custom_call.1} parent=11 // pred_check
          %p279 = pneg %p179
        $region30: #{tpu_custom_call.1} parent=11 // pred_check_branch
          %281 = sbr.rel (%p279) target = $region32
        $region31: #{tpu_custom_call.1} parent=11 // pred_region
          _
        $region32: #{tpu_custom_call.1} parent=11 // pred_fallthru
          _
        // Predicated region
        $region33: #{tpu_custom_call.1} parent=11 // pred_check
          %p282 = pneg %p200
        $region34: #{tpu_custom_call.1} parent=11 // pred_check_branch
          %284 = sbr.rel (%p282) target = $region36
        $region35: #{tpu_custom_call.1} parent=11 // pred_region
          _
        $region36: #{tpu_custom_call.1} parent=11 // pred_fallthru
          _
      $region12: #{tpu_custom_call.1} parent=5 // pred_fallthru
        _
      %p285 = scmp.lt.s32.totalorder %s22, 2
      // Predicated region
      $region37: #{tpu_custom_call.1} parent=5 // pred_check
        %p286 = pneg %p285
      $region38: #{tpu_custom_call.1} parent=5 // pred_check_branch
        %288 = sbr.rel (%p286) target = $region40
      $region39: #{tpu_custom_call.1} parent=5 // pred_region
        // Predicated region
        $region41: #{tpu_custom_call.1} parent=39 // pred_check
          %p289 = pneg %p42
        $region42: #{tpu_custom_call.1} parent=39 // pred_check_branch
          %291 = sbr.rel (%p289) target = $region44
        $region43: #{tpu_custom_call.1} parent=39 // pred_region
          %p292 = scmp.lt.s32.totalorder %s22, 1
          %s293 = scalar_select %p292, %s22, 1
          %s294 = smul.addr %s293, 16
          %s295 = smul.addr %s294, 8
          %s296 = scalar_lea.vmem %s0, %s295
        $region44: #{tpu_custom_call.1} parent=39 // pred_fallthru
          _
        // Predicated region
        $region45: #{tpu_custom_call.1} parent=39 // pred_check
          %p297 = pneg %p68
        $region46: #{tpu_custom_call.1} parent=39 // pred_check_branch
          %299 = sbr.rel (%p297) target = $region48
        $region47: #{tpu_custom_call.1} parent=39 // pred_region
          %p300 = scmp.lt.s32.totalorder %s22, 1
          %s301 = scalar_select %p300, %s22, 1
          %s302 = smul.addr %s301, 16
          %s303 = smul.addr %s302, 8
          %s304 = scalar_lea.vmem %s1, %s303
        $region48: #{tpu_custom_call.1} parent=39 // pred_fallthru
          _
      $region40: #{tpu_custom_call.1} parent=5 // pred_fallthru
        _
      %p305 = scmp.le.s32.totalorder 1, %s22
      %p306 = scmp.lt.s32.totalorder %s22, 3
      %p307 = pnand %p305, %p306
      %p308 = pneg %p307
      // Predicated region
      $region49: #{tpu_custom_call.1} parent=5 // pred_check
        _
      $region50: #{tpu_custom_call.1} parent=5 // pred_check_branch
        %310 = sbr.rel (%p307) target = $region52
      $region51: #{tpu_custom_call.1} parent=5 // pred_region
        %s311 = ssub.s32 %s22, 1
        %p312 = scmp.lt.s32.totalorder %s27, 1
        %s313 = scalar_select %p312, %s27, 1
        %s314 = smul.addr %s313, 16
        %s315 = smul.addr %s314, 8
        %s316 = scalar_lea.vmem %s0, %s315
        %p317 = pneg %p48
        %p318 = pneg %p45
        %p319 = scmp.lt.s32.totalorder %s27, 1
        %s320 = scalar_select %p319, %s27, 1
        %s321 = smul.addr %s320, 16
        %s322 = smul.addr %s321, 8
        %s323 = scalar_lea.vmem %s1, %s322
        %p324 = pneg %p74
        %p325 = pneg %p71
        %p326 = pneg %p95
        %p327 = pneg %p92
        %p328 = pneg %p116
        %p329 = pneg %p113
        %p330 = pneg %p137
        %p331 = pneg %p134
        %p332 = pneg %p158
        %p333 = pneg %p155
        %p334 = pneg %p179
        %p335 = pneg %p176
        %p336 = pneg %p200
        %p337 = pneg %p197
        %p338 = pneg %p226
        %p339 = pneg %p223
        %s340 = sand.u32 %s213, 1
        %s341 = scalar_lea.sflag [#allocation3], %s340
        %s342 = sand.u32 %s213, 1
        %s343 = smul.addr %s342, 128
        %s344 = scalar_lea.vmem [#allocation2], %s343
        %p345 = pneg %p252
        %p346 = pneg %p249
        %s347 = sand.u32 %s239, 1
        %s348 = scalar_lea.sflag [#allocation5], %s347
        %s349 = sand.u32 %s239, 1
        %s350 = smul.addr %s349, 128
        %s351 = scalar_lea.vmem [#allocation4], %s350
        %p352 = scmp.lt.s32.totalorder %s27, 1
        %s353 = scalar_select %p352, %s27, 1
        %s354 = smul.addr %s353, 16
        %s355 = smul.addr %s354, 8
        %s356 = scalar_lea.vmem %s0, %s355
        %p357 = scmp.lt.s32.totalorder %s27, 1
        %s358 = scalar_select %p357, %s27, 1
        %s359 = smul.addr %s358, 16
        %s360 = smul.addr %s359, 8
        %s361 = scalar_lea.vmem %s1, %s360
        %v362 = vld [vmem:[%s356] sm:$0xff]
        %v363 = vld [vmem:[%s356 + $0x8] sm:$0xff]
        %v364 = vld [vmem:[%s356 + $0x10] sm:$0xff]
        %v365 = vld [vmem:[%s356 + $0x18] sm:$0xff]
        %v366 = vld [vmem:[%s356 + $0x20] sm:$0xff]
        %v367 = vld [vmem:[%s356 + $0x28] sm:$0xff]
        %v368 = vld [vmem:[%s356 + $0x30] sm:$0xff]
        %v369 = vld [vmem:[%s356 + $0x38] sm:$0xff]
        %v370 = vld [vmem:[%s356 + $0x40] sm:$0xff]
        %v371 = vld [vmem:[%s356 + $0x48] sm:$0xff]
        %v372 = vld [vmem:[%s356 + $0x50] sm:$0xff]
        %v373 = vld [vmem:[%s356 + $0x58] sm:$0xff]
        %v374 = vld [vmem:[%s356 + $0x60] sm:$0xff]
        %v375 = vld [vmem:[%s356 + $0x68] sm:$0xff]
        %v376 = vld [vmem:[%s356 + $0x70] sm:$0xff]
        %v377 = vld [vmem:[%s356 + $0x78] sm:$0xff]
        %vm378 = vcmask 261120
        %v379 = vsel %vm378, %v362, 0.0
        %380 = vadd.xlane.f32.xlu0 %v379
        %v381 = vpop.xlane.xlu0 %380
        %v382 = vsel %vm378, %v363, 0.0
        %383 = vadd.xlane.f32.xlu0 %v382
        %v384 = vpop.xlane.xlu0 %383
        %v385 = vsel %vm378, %v364, 0.0
        %386 = vadd.xlane.f32.xlu0 %v385
        %v387 = vpop.xlane.xlu0 %386
        %v388 = vsel %vm378, %v365, 0.0
        %389 = vadd.xlane.f32.xlu0 %v388
        %v390 = vpop.xlane.xlu0 %389
        %v391 = vsel %vm378, %v366, 0.0
        %392 = vadd.xlane.f32.xlu0 %v391
        %v393 = vpop.xlane.xlu0 %392
        %v394 = vsel %vm378, %v367, 0.0
        %395 = vadd.xlane.f32.xlu0 %v394
        %v396 = vpop.xlane.xlu0 %395
        %v397 = vsel %vm378, %v368, 0.0
        %398 = vadd.xlane.f32.xlu0 %v397
        %v399 = vpop.xlane.xlu0 %398
        %v400 = vsel %vm378, %v369, 0.0
        %401 = vadd.xlane.f32.xlu0 %v400
        %v402 = vpop.xlane.xlu0 %401
        %v403 = vsel %vm378, %v370, 0.0
        %404 = vadd.xlane.f32.xlu0 %v403
        %v405 = vpop.xlane.xlu0 %404
        %v406 = vsel %vm378, %v371, 0.0
        %407 = vadd.xlane.f32.xlu0 %v406
        %v408 = vpop.xlane.xlu0 %407
        %v409 = vsel %vm378, %v372, 0.0
        %410 = vadd.xlane.f32.xlu0 %v409
        %v411 = vpop.xlane.xlu0 %410
        %v412 = vsel %vm378, %v373, 0.0
        %413 = vadd.xlane.f32.xlu0 %v412
        %v414 = vpop.xlane.xlu0 %413
        %v415 = vsel %vm378, %v374, 0.0
        %416 = vadd.xlane.f32.xlu0 %v415
        %v417 = vpop.xlane.xlu0 %416
        %v418 = vsel %vm378, %v375, 0.0
        %419 = vadd.xlane.f32.xlu0 %v418
        %v420 = vpop.xlane.xlu0 %419
        %v421 = vsel %vm378, %v376, 0.0
        %422 = vadd.xlane.f32.xlu0 %v421
        %v423 = vpop.xlane.xlu0 %422
        %v424 = vsel %vm378, %v377, 0.0
        %425 = vadd.xlane.f32.xlu0 %v424
        %v426 = vpop.xlane.xlu0 %425
        %v427 = vrcp.pop 32.0
        %v428 = vmul.f32 %v381, %v427
        %v429 = vmul.f32 %v384, %v427
        %v430 = vmul.f32 %v387, %v427
        %v431 = vmul.f32 %v390, %v427
        %v432 = vmul.f32 %v393, %v427
        %v433 = vmul.f32 %v396, %v427
        %v434 = vmul.f32 %v399, %v427
        %v435 = vmul.f32 %v402, %v427
        %v436 = vmul.f32 %v405, %v427
        %v437 = vmul.f32 %v408, %v427
        %v438 = vmul.f32 %v411, %v427
        %v439 = vmul.f32 %v414, %v427
        %v440 = vmul.f32 %v417, %v427
        %v441 = vmul.f32 %v420, %v427
        %v442 = vmul.f32 %v423, %v427
        %v443 = vmul.f32 %v426, %v427
        %v444 = vsub.f32 %v362, %v428
        %v445 = vsub.f32 %v363, %v429
        %v446 = vsub.f32 %v364, %v430
        %v447 = vsub.f32 %v365, %v431
        %v448 = vsub.f32 %v366, %v432
        %v449 = vsub.f32 %v367, %v433
        %v450 = vsub.f32 %v368, %v434
        %v451 = vsub.f32 %v369, %v435
        %v452 = vsub.f32 %v370, %v436
        %v453 = vsub.f32 %v371, %v437
        %v454 = vsub.f32 %v372, %v438
        %v455 = vsub.f32 %v373, %v439
        %v456 = vsub.f32 %v374, %v440
        %v457 = vsub.f32 %v375, %v441
        %v458 = vsub.f32 %v376, %v442
        %v459 = vsub.f32 %v377, %v443
        %v460 = vmul.f32 %v444, %v444
        %v461 = vmul.f32 %v445, %v445
        %v462 = vmul.f32 %v446, %v446
        %v463 = vmul.f32 %v447, %v447
        %v464 = vmul.f32 %v448, %v448
        %v465 = vmul.f32 %v449, %v449
        %v466 = vmul.f32 %v450, %v450
        %v467 = vmul.f32 %v451, %v451
        %v468 = vmul.f32 %v452, %v452
        %v469 = vmul.f32 %v453, %v453
        %v470 = vmul.f32 %v454, %v454
        %v471 = vmul.f32 %v455, %v455
        %v472 = vmul.f32 %v456, %v456
        %v473 = vmul.f32 %v457, %v457
        %v474 = vmul.f32 %v458, %v458
        %v475 = vmul.f32 %v459, %v459
        %v476 = vsel %vm378, %v460, 0.0
        %477 = vadd.xlane.f32.xlu0 %v476
        %v478 = vpop.xlane.xlu0 %477
        %v479 = vsel %vm378, %v461, 0.0
        %480 = vadd.xlane.f32.xlu0 %v479
        %v481 = vpop.xlane.xlu0 %480
        %v482 = vsel %vm378, %v462, 0.0
        %483 = vadd.xlane.f32.xlu0 %v482
        %v484 = vpop.xlane.xlu0 %483
        %v485 = vsel %vm378, %v463, 0.0
        %486 = vadd.xlane.f32.xlu0 %v485
        %v487 = vpop.xlane.xlu0 %486
        %v488 = vsel %vm378, %v464, 0.0
        %489 = vadd.xlane.f32.xlu0 %v488
        %v490 = vpop.xlane.xlu0 %489
        %v491 = vsel %vm378, %v465, 0.0
        %492 = vadd.xlane.f32.xlu0 %v491
        %v493 = vpop.xlane.xlu0 %492
        %v494 = vsel %vm378, %v466, 0.0
        %495 = vadd.xlane.f32.xlu0 %v494
        %v496 = vpop.xlane.xlu0 %495
        %v497 = vsel %vm378, %v467, 0.0
        %498 = vadd.xlane.f32.xlu0 %v497
        %v499 = vpop.xlane.xlu0 %498
        %v500 = vsel %vm378, %v468, 0.0
        %501 = vadd.xlane.f32.xlu0 %v500
        %v502 = vpop.xlane.xlu0 %501
        %v503 = vsel %vm378, %v469, 0.0
        %504 = vadd.xlane.f32.xlu0 %v503
        %v505 = vpop.xlane.xlu0 %504
        %v506 = vsel %vm378, %v470, 0.0
        %507 = vadd.xlane.f32.xlu0 %v506
        %v508 = vpop.xlane.xlu0 %507
        %v509 = vsel %vm378, %v471, 0.0
        %510 = vadd.xlane.f32.xlu0 %v509
        %v511 = vpop.xlane.xlu0 %510
        %v512 = vsel %vm378, %v472, 0.0
        %513 = vadd.xlane.f32.xlu0 %v512
        %v514 = vpop.xlane.xlu0 %513
        %v515 = vsel %vm378, %v473, 0.0
        %516 = vadd.xlane.f32.xlu0 %v515
        %v517 = vpop.xlane.xlu0 %516
        %v518 = vsel %vm378, %v474, 0.0
        %519 = vadd.xlane.f32.xlu0 %v518
        %v520 = vpop.xlane.xlu0 %519
        %v521 = vsel %vm378, %v475, 0.0
        %522 = vadd.xlane.f32.xlu0 %v521
        %v523 = vpop.xlane.xlu0 %522
        %v524 = vmul.f32 %v478, 0.032258064
        %v525 = vmul.f32 %v481, 0.032258064
        %v526 = vmul.f32 %v484, 0.032258064
        %v527 = vmul.f32 %v487, 0.032258064
        %v528 = vmul.f32 %v490, 0.032258064
        %v529 = vmul.f32 %v493, 0.032258064
        %v530 = vmul.f32 %v496, 0.032258064
        %v531 = vmul.f32 %v499, 0.032258064
        %v532 = vmul.f32 %v502, 0.032258064
        %v533 = vmul.f32 %v505, 0.032258064
        %v534 = vmul.f32 %v508, 0.032258064
        %v535 = vmul.f32 %v511, 0.032258064
        %v536 = vmul.f32 %v514, 0.032258064
        %v537 = vmul.f32 %v517, 0.032258064
        %v538 = vmul.f32 %v520, 0.032258064
        %v539 = vmul.f32 %v523, 0.032258064
        %v540 = vrsqrt.pop %v524
        %v541 = vmul.f32 %v524, %v540
        %vm542 = vcmp.eq.f32.partialorder %v524, inf
        %v543 = vsel %vm542, %v524, %v541
        %vm544 = vcmp.eq.f32.partialorder %v524, 0.0
        %v545 = vand.u32 %v524, 2147483648
        %v546 = vsel %vm544, %v545, %v543
        %v547 = vrsqrt.pop %v525
        %v548 = vmul.f32 %v525, %v547
        %vm549 = vcmp.eq.f32.partialorder %v525, inf
        %v550 = vsel %vm549, %v525, %v548
        %vm551 = vcmp.eq.f32.partialorder %v525, 0.0
        %v552 = vand.u32 %v525, 2147483648
        %v553 = vsel %vm551, %v552, %v550
        %v554 = vrsqrt.pop %v526
        %v555 = vmul.f32 %v526, %v554
        %vm556 = vcmp.eq.f32.partialorder %v526, inf
        %v557 = vsel %vm556, %v526, %v555
        %vm558 = vcmp.eq.f32.partialorder %v526, 0.0
        %v559 = vand.u32 %v526, 2147483648
        %v560 = vsel %vm558, %v559, %v557
        %v561 = vrsqrt.pop %v527
        %v562 = vmul.f32 %v527, %v561
        %vm563 = vcmp.eq.f32.partialorder %v527, inf
        %v564 = vsel %vm563, %v527, %v562
        %vm565 = vcmp.eq.f32.partialorder %v527, 0.0
        %v566 = vand.u32 %v527, 2147483648
        %v567 = vsel %vm565, %v566, %v564
        %v568 = vrsqrt.pop %v528
        %v569 = vmul.f32 %v528, %v568
        %vm570 = vcmp.eq.f32.partialorder %v528, inf
        %v571 = vsel %vm570, %v528, %v569
        %vm572 = vcmp.eq.f32.partialorder %v528, 0.0
        %v573 = vand.u32 %v528, 2147483648
        %v574 = vsel %vm572, %v573, %v571
        %v575 = vrsqrt.pop %v529
        %v576 = vmul.f32 %v529, %v575
        %vm577 = vcmp.eq.f32.partialorder %v529, inf
        %v578 = vsel %vm577, %v529, %v576
        %vm579 = vcmp.eq.f32.partialorder %v529, 0.0
        %v580 = vand.u32 %v529, 2147483648
        %v581 = vsel %vm579, %v580, %v578
        %v582 = vrsqrt.pop %v530
        %v583 = vmul.f32 %v530, %v582
        %vm584 = vcmp.eq.f32.partialorder %v530, inf
        %v585 = vsel %vm584, %v530, %v583
        %vm586 = vcmp.eq.f32.partialorder %v530, 0.0
        %v587 = vand.u32 %v530, 2147483648
        %v588 = vsel %vm586, %v587, %v585
        %v589 = vrsqrt.pop %v531
        %v590 = vmul.f32 %v531, %v589
        %vm591 = vcmp.eq.f32.partialorder %v531, inf
        %v592 = vsel %vm591, %v531, %v590
        %vm593 = vcmp.eq.f32.partialorder %v531, 0.0
        %v594 = vand.u32 %v531, 2147483648
        %v595 = vsel %vm593, %v594, %v592
        %v596 = vrsqrt.pop %v532
        %v597 = vmul.f32 %v532, %v596
        %vm598 = vcmp.eq.f32.partialorder %v532, inf
        %v599 = vsel %vm598, %v532, %v597
        %vm600 = vcmp.eq.f32.partialorder %v532, 0.0
        %v601 = vand.u32 %v532, 2147483648
        %v602 = vsel %vm600, %v601, %v599
        %v603 = vrsqrt.pop %v533
        %v604 = vmul.f32 %v533, %v603
        %vm605 = vcmp.eq.f32.partialorder %v533, inf
        %v606 = vsel %vm605, %v533, %v604
        %vm607 = vcmp.eq.f32.partialorder %v533, 0.0
        %v608 = vand.u32 %v533, 2147483648
        %v609 = vsel %vm607, %v608, %v606
        %v610 = vrsqrt.pop %v534
        %v611 = vmul.f32 %v534, %v610
        %vm612 = vcmp.eq.f32.partialorder %v534, inf
        %v613 = vsel %vm612, %v534, %v611
        %vm614 = vcmp.eq.f32.partialorder %v534, 0.0
        %v615 = vand.u32 %v534, 2147483648
        %v616 = vsel %vm614, %v615, %v613
        %v617 = vrsqrt.pop %v535
        %v618 = vmul.f32 %v535, %v617
        %vm619 = vcmp.eq.f32.partialorder %v535, inf
        %v620 = vsel %vm619, %v535, %v618
        %vm621 = vcmp.eq.f32.partialorder %v535, 0.0
        %v622 = vand.u32 %v535, 2147483648
        %v623 = vsel %vm621, %v622, %v620
        %v624 = vrsqrt.pop %v536
        %v625 = vmul.f32 %v536, %v624
        %vm626 = vcmp.eq.f32.partialorder %v536, inf
        %v627 = vsel %vm626, %v536, %v625
        %vm628 = vcmp.eq.f32.partialorder %v536, 0.0
        %v629 = vand.u32 %v536, 2147483648
        %v630 = vsel %vm628, %v629, %v627
        %v631 = vrsqrt.pop %v537
        %v632 = vmul.f32 %v537, %v631
        %vm633 = vcmp.eq.f32.partialorder %v537, inf
        %v634 = vsel %vm633, %v537, %v632
        %vm635 = vcmp.eq.f32.partialorder %v537, 0.0
        %v636 = vand.u32 %v537, 2147483648
        %v637 = vsel %vm635, %v636, %v634
        %v638 = vrsqrt.pop %v538
        %v639 = vmul.f32 %v538, %v638
        %vm640 = vcmp.eq.f32.partialorder %v538, inf
        %v641 = vsel %vm640, %v538, %v639
        %vm642 = vcmp.eq.f32.partialorder %v538, 0.0
        %v643 = vand.u32 %v538, 2147483648
        %v644 = vsel %vm642, %v643, %v641
        %v645 = vrsqrt.pop %v539
        %v646 = vmul.f32 %v539, %v645
        %vm647 = vcmp.eq.f32.partialorder %v539, inf
        %v648 = vsel %vm647, %v539, %v646
        %vm649 = vcmp.eq.f32.partialorder %v539, 0.0
        %v650 = vand.u32 %v539, 2147483648
        %v651 = vsel %vm649, %v650, %v648
        %v652 = vadd.f32 %v546, 1e-06
        %v653 = vadd.f32 %v553, 1e-06
        %v654 = vadd.f32 %v560, 1e-06
        %v655 = vadd.f32 %v567, 1e-06
        %v656 = vadd.f32 %v574, 1e-06
        %v657 = vadd.f32 %v581, 1e-06
        %v658 = vadd.f32 %v588, 1e-06
        %v659 = vadd.f32 %v595, 1e-06
        %v660 = vadd.f32 %v602, 1e-06
        %v661 = vadd.f32 %v609, 1e-06
        %v662 = vadd.f32 %v616, 1e-06
        %v663 = vadd.f32 %v623, 1e-06
        %v664 = vadd.f32 %v630, 1e-06
        %v665 = vadd.f32 %v637, 1e-06
        %v666 = vadd.f32 %v644, 1e-06
        %v667 = vadd.f32 %v651, 1e-06
        %v668 = vrcp.pop %v652
        %v669 = vmul.f32 1.0, %v668
        %v670 = vrcp.pop %v653
        %v671 = vmul.f32 1.0, %v670
        %v672 = vrcp.pop %v654
        %v673 = vmul.f32 1.0, %v672
        %v674 = vrcp.pop %v655
        %v675 = vmul.f32 1.0, %v674
        %v676 = vrcp.pop %v656
        %v677 = vmul.f32 1.0, %v676
        %v678 = vrcp.pop %v657
        %v679 = vmul.f32 1.0, %v678
        %v680 = vrcp.pop %v658
        %v681 = vmul.f32 1.0, %v680
        %v682 = vrcp.pop %v659
        %v683 = vmul.f32 1.0, %v682
        %v684 = vrcp.pop %v660
        %v685 = vmul.f32 1.0, %v684
        %v686 = vrcp.pop %v661
        %v687 = vmul.f32 1.0, %v686
        %v688 = vrcp.pop %v662
        %v689 = vmul.f32 1.0, %v688
        %v690 = vrcp.pop %v663
        %v691 = vmul.f32 1.0, %v690
        %v692 = vrcp.pop %v664
        %v693 = vmul.f32 1.0, %v692
        %v694 = vrcp.pop %v665
        %v695 = vmul.f32 1.0, %v694
        %v696 = vrcp.pop %v666
        %v697 = vmul.f32 1.0, %v696
        %v698 = vrcp.pop %v667
        %v699 = vmul.f32 1.0, %v698
        %v700 = vld [vmem:[%s2] sm:$0x1]
        %v702 = vlaneseq
        %v703 = vshrl.u32 %v702, 7
        %v704 = vsub.s32 0, %v703
        %v705 = vrot.slane %v700, %v704
        %v707 = vmul.f32 %v705, %v444
        %v708 = vmul.f32 %v705, %v445
        %v709 = vmul.f32 %v705, %v446
        %v710 = vmul.f32 %v705, %v447
        %v711 = vmul.f32 %v705, %v448
        %v712 = vmul.f32 %v705, %v449
        %v713 = vmul.f32 %v705, %v450
        %v714 = vmul.f32 %v705, %v451
        %v715 = vmul.f32 %v705, %v452
        %v716 = vmul.f32 %v705, %v453
        %v717 = vmul.f32 %v705, %v454
        %v718 = vmul.f32 %v705, %v455
        %v719 = vmul.f32 %v705, %v456
        %v720 = vmul.f32 %v705, %v457
        %v721 = vmul.f32 %v705, %v458
        %v722 = vmul.f32 %v705, %v459
        %v723 = vmul.f32 %v707, %v669
        %v724 = vmul.f32 %v708, %v671
        %v725 = vmul.f32 %v709, %v673
        %v726 = vmul.f32 %v710, %v675
        %v727 = vmul.f32 %v711, %v677
        %v728 = vmul.f32 %v712, %v679
        %v729 = vmul.f32 %v713, %v681
        %v730 = vmul.f32 %v714, %v683
        %v731 = vmul.f32 %v715, %v685
        %v732 = vmul.f32 %v716, %v687
        %v733 = vmul.f32 %v717, %v689
        %v734 = vmul.f32 %v718, %v691
        %v735 = vmul.f32 %v719, %v693
        %v736 = vmul.f32 %v720, %v695
        %v737 = vmul.f32 %v721, %v697
        %v738 = vmul.f32 %v722, %v699
        %v739 = vld [vmem:[%s3] sm:$0x1]
        %v741 = vlaneseq
        %v742 = vshrl.u32 %v741, 7
        %v743 = vsub.s32 0, %v742
        %v744 = vrot.slane %v739, %v743
        %v746 = vadd.f32 %v723, %v744
        %v747 = vadd.f32 %v724, %v744
        %v748 = vadd.f32 %v725, %v744
        %v749 = vadd.f32 %v726, %v744
        %v750 = vadd.f32 %v727, %v744
        %v751 = vadd.f32 %v728, %v744
        %v752 = vadd.f32 %v729, %v744
        %v753 = vadd.f32 %v730, %v744
        %v754 = vadd.f32 %v731, %v744
        %v755 = vadd.f32 %v732, %v744
        %v756 = vadd.f32 %v733, %v744
        %v757 = vadd.f32 %v734, %v744
        %v758 = vadd.f32 %v735, %v744
        %v759 = vadd.f32 %v736, %v744
        %v760 = vadd.f32 %v737, %v744
        %v761 = vadd.f32 %v738, %v744
        %v762 = vld [vmem:[%s4] sm:$0xff]
        %v763 = vld [vmem:[%s4 + $0x8] sm:$0xff]
        %v764 = vld [vmem:[%s4 + $0x10] sm:$0xff]
        %v765 = vld [vmem:[%s4 + $0x18] sm:$0xff]
        %v766 = vld [vmem:[%s5] sm:$0x1]
        %v768 = vlaneseq
        %v769 = vshrl.u32 %v768, 7
        %v770 = vsub.s32 0, %v769
        %v771 = vrot.slane %v766, %v770
        %v774 = vsel %vm378, %v746, 0
        %v777 = vsel %vm378, %v747, 0
        %v780 = vsel %vm378, %v748, 0
        %v783 = vsel %vm378, %v749, 0
        %v786 = vsel %vm378, %v750, 0
        %v789 = vsel %vm378, %v751, 0
        %v792 = vsel %vm378, %v752, 0
        %v795 = vsel %vm378, %v753, 0
        %v798 = vsel %vm378, %v754, 0
        %v801 = vsel %vm378, %v755, 0
        %v804 = vsel %vm378, %v756, 0
        %v807 = vsel %vm378, %v757, 0
        %v810 = vsel %vm378, %v758, 0
        %v813 = vsel %vm378, %v759, 0
        %v816 = vsel %vm378, %v760, 0
        %v819 = vsel %vm378, %v761, 0
        %821 = vmatprep.subr.mxu0 0.0
        %822 = vmatpush1.msra.mxu0 0.0
        %823 = vmatprep.subr.mxu0 0.0
        %824 = vmatpush1.msra.mxu0 0.0
        %825 = vmatprep.subr.mxu0 0.0
        %826 = vmatpush1.msra.mxu0 0.0
        %827 = vmatprep.subr.mxu0 0.0
        %828 = vmatpush1.msra.mxu0 0.0
        %829 = vmatprep.subr.mxu0 0.0
        %830 = vmatpush1.msra.mxu0 0.0
        %831 = vmatprep.subr.mxu0 0.0
        %832 = vmatpush1.msra.mxu0 0.0
        %833 = vmatprep.subr.mxu0 0.0
        %834 = vmatpush1.msra.mxu0 0.0
        %835 = vmatprep.subr.mxu0 0.0
        %836 = vmatpush1.msra.mxu0 0.0
        %837 = vmatprep.subr.mxu0 0.0
        %838 = vmatpush1.msra.mxu0 0.0
        %839 = vmatprep.subr.mxu0 0.0
        %840 = vmatpush1.msra.mxu0 0.0
        %841 = vmatprep.subr.mxu0 0.0
        %842 = vmatpush1.msra.mxu0 0.0
        %843 = vmatprep.subr.mxu0 0.0
        %844 = vmatpush1.msra.mxu0 0.0
        %845 = vmatprep.subr.mxu0 0.0
        %846 = vmatpush1.msra.mxu0 %v765
        %847 = vmatprep.subr.mxu0 0.0
        %848 = vmatpush1.msra.mxu0 %v764
        %849 = vmatprep.subr.mxu0 0.0
        %850 = vmatpush1.msra.mxu0 %v763
        %851 = vmatprep.subr.mxu0 0.0
        %852 = vmatpush1.msra.mxu0 %v762
        %853 = vmatprep.subr.mxu0 0.0
        %854 = vmatpush2.msra.mxu0 0.0
        %855 = vmatprep.subr.mxu0 0.0
        %856 = vmatpush2.msra.mxu0 0.0
        %857 = vmatprep.subr.mxu0 0.0
        %858 = vmatpush2.msra.mxu0 0.0
        %859 = vmatprep.subr.mxu0 0.0
        %860 = vmatpush2.msra.mxu0 0.0
        %861 = vmatprep.subr.mxu0 0.0
        %862 = vmatpush2.msra.mxu0 0.0
        %863 = vmatprep.subr.mxu0 0.0
        %864 = vmatpush2.msra.mxu0 0.0
        %865 = vmatprep.subr.mxu0 0.0
        %866 = vmatpush2.msra.mxu0 0.0
        %867 = vmatprep.subr.mxu0 0.0
        %868 = vmatpush2.msra.mxu0 0.0
        %869 = vmatprep.subr.mxu0 0.0
        %870 = vmatpush2.msra.mxu0 0.0
        %871 = vmatprep.subr.mxu0 0.0
        %872 = vmatpush2.msra.mxu0 0.0
        %873 = vmatprep.subr.mxu0 0.0
        %874 = vmatpush2.msra.mxu0 0.0
        %875 = vmatprep.subr.mxu0 0.0
        %876 = vmatpush2.msra.mxu0 0.0
        %877 = vmatprep.subr.mxu0 0.0
        %878 = vmatpush2.msra.mxu0 0.0
        %879 = vmatprep.subr.mxu0 0.0
        %880 = vmatpush2.msra.mxu0 0.0
        %881 = vmatprep.subr.mxu0 0.0
        %882 = vmatpush2.msra.mxu0 0.0
        %883 = vmatprep.subr.mxu0 0.0
        %884 = vmatpush2.msra.mxu0 0.0
        %885 = vmatprep.mubr.f32.mxu0 0.0
        %886 = vmatmul.mubr.f32.gmra.mxu0 %v774
        %v887 = vpop.f32.mrf.mxu0
        %v888 = vadd.f32 %v771, %v887
        %v889 = vpop.f32.mrf.mxu0
        %890 = vmatprep.mubr.f32.mxu0 0.0
        %891 = vmatmul.mubr.f32.gmra.mxu0 %v777
        %v892 = vpop.f32.mrf.mxu0
        %v893 = vadd.f32 %v771, %v892
        %v894 = vpop.f32.mrf.mxu0
        %895 = vmatprep.mubr.f32.mxu0 0.0
        %896 = vmatmul.mubr.f32.gmra.mxu0 %v780
        %v897 = vpop.f32.mrf.mxu0
        %v898 = vadd.f32 %v771, %v897
        %v899 = vpop.f32.mrf.mxu0
        %900 = vmatprep.mubr.f32.mxu0 0.0
        %901 = vmatmul.mubr.f32.gmra.mxu0 %v783
        %v902 = vpop.f32.mrf.mxu0
        %v903 = vadd.f32 %v771, %v902
        %v904 = vpop.f32.mrf.mxu0
        %905 = vmatprep.mubr.f32.mxu0 0.0
        %906 = vmatmul.mubr.f32.gmra.mxu0 %v786
        %v907 = vpop.f32.mrf.mxu0
        %v908 = vadd.f32 %v771, %v907
        %v909 = vpop.f32.mrf.mxu0
        %910 = vmatprep.mubr.f32.mxu0 0.0
        %911 = vmatmul.mubr.f32.gmra.mxu0 %v789
        %v912 = vpop.f32.mrf.mxu0
        %v913 = vadd.f32 %v771, %v912
        %v914 = vpop.f32.mrf.mxu0
        %915 = vmatprep.mubr.f32.mxu0 0.0
        %916 = vmatmul.mubr.f32.gmra.mxu0 %v792
        %v917 = vpop.f32.mrf.mxu0
        %v918 = vadd.f32 %v771, %v917
        %v919 = vpop.f32.mrf.mxu0
        %920 = vmatprep.mubr.f32.mxu0 0.0
        %921 = vmatmul.mubr.f32.gmra.mxu0 %v795
        %v922 = vpop.f32.mrf.mxu0
        %v923 = vadd.f32 %v771, %v922
        %v924 = vpop.f32.mrf.mxu0
        %925 = vmatprep.mubr.f32.mxu0 0.0
        %926 = vmatmul.mubr.f32.gmra.mxu0 %v798
        %v927 = vpop.f32.mrf.mxu0
        %v928 = vadd.f32 %v771, %v927
        %v929 = vpop.f32.mrf.mxu0
        %930 = vmatprep.mubr.f32.mxu0 0.0
        %931 = vmatmul.mubr.f32.gmra.mxu0 %v801
        %v932 = vpop.f32.mrf.mxu0
        %v933 = vadd.f32 %v771, %v932
        %v934 = vpop.f32.mrf.mxu0
        %935 = vmatprep.mubr.f32.mxu0 0.0
        %936 = vmatmul.mubr.f32.gmra.mxu0 %v804
        %v937 = vpop.f32.mrf.mxu0
        %v938 = vadd.f32 %v771, %v937
        %v939 = vpop.f32.mrf.mxu0
        %940 = vmatprep.mubr.f32.mxu0 0.0
        %941 = vmatmul.mubr.f32.gmra.mxu0 %v807
        %v942 = vpop.f32.mrf.mxu0
        %v943 = vadd.f32 %v771, %v942
        %v944 = vpop.f32.mrf.mxu0
        %945 = vmatprep.mubr.f32.mxu0 0.0
        %946 = vmatmul.mubr.f32.gmra.mxu0 %v810
        %v947 = vpop.f32.mrf.mxu0
        %v948 = vadd.f32 %v771, %v947
        %v949 = vpop.f32.mrf.mxu0
        %950 = vmatprep.mubr.f32.mxu0 0.0
        %951 = vmatmul.mubr.f32.gmra.mxu0 %v813
        %v952 = vpop.f32.mrf.mxu0
        %v953 = vadd.f32 %v771, %v952
        %v954 = vpop.f32.mrf.mxu0
        %955 = vmatprep.mubr.f32.mxu0 0.0
        %956 = vmatmul.mubr.f32.gmra.mxu0 %v816
        %v957 = vpop.f32.mrf.mxu0
        %v958 = vadd.f32 %v771, %v957
        %v959 = vpop.f32.mrf.mxu0
        %960 = vmatprep.mubr.f32.mxu0 0.0
        %961 = vmatmul.mubr.f32.gmra.mxu0 %v819
        %v962 = vpop.f32.mrf.mxu0
        %v963 = vadd.f32 %v771, %v962
        %v964 = vpop.f32.mrf.mxu0
        %965 = vdwg.mxu0
        %v966 = vld [vmem:[%s6] sm:$0xff]
        %v967 = vld [vmem:[%s6 + $0x8] sm:$0xff]
        %v968 = vld [vmem:[%s6 + $0x10] sm:$0xff]
        %v969 = vld [vmem:[%s6 + $0x18] sm:$0xff]
        %v970 = vld [vmem:[%s7] sm:$0x1]
        %v972 = vlaneseq
        %v973 = vshrl.u32 %v972, 7
        %v974 = vsub.s32 0, %v973
        %v975 = vrot.slane %v970, %v974
        %977 = vmatprep.subr.mxu0 0.0
        %978 = vmatpush1.msra.mxu0 0.0
        %979 = vmatprep.subr.mxu0 0.0
        %980 = vmatpush1.msra.mxu0 0.0
        %981 = vmatprep.subr.mxu0 0.0
        %982 = vmatpush1.msra.mxu0 0.0
        %983 = vmatprep.subr.mxu0 0.0
        %984 = vmatpush1.msra.mxu0 0.0
        %985 = vmatprep.subr.mxu0 0.0
        %986 = vmatpush1.msra.mxu0 0.0
        %987 = vmatprep.subr.mxu0 0.0
        %988 = vmatpush1.msra.mxu0 0.0
        %989 = vmatprep.subr.mxu0 0.0
        %990 = vmatpush1.msra.mxu0 0.0
        %991 = vmatprep.subr.mxu0 0.0
        %992 = vmatpush1.msra.mxu0 0.0
        %993 = vmatprep.subr.mxu0 0.0
        %994 = vmatpush1.msra.mxu0 0.0
        %995 = vmatprep.subr.mxu0 0.0
        %996 = vmatpush1.msra.mxu0 0.0
        %997 = vmatprep.subr.mxu0 0.0
        %998 = vmatpush1.msra.mxu0 0.0
        %999 = vmatprep.subr.mxu0 0.0
        %1000 = vmatpush1.msra.mxu0 0.0
        %1001 = vmatprep.subr.mxu0 0.0
        %1002 = vmatpush1.msra.mxu0 %v969
        %1003 = vmatprep.subr.mxu0 0.0
        %1004 = vmatpush1.msra.mxu0 %v968
        %1005 = vmatprep.subr.mxu0 0.0
        %1006 = vmatpush1.msra.mxu0 %v967
        %1007 = vmatprep.subr.mxu0 0.0
        %1008 = vmatpush1.msra.mxu0 %v966
        %1009 = vmatprep.subr.mxu0 0.0
        %1010 = vmatpush2.msra.mxu0 0.0
        %1011 = vmatprep.subr.mxu0 0.0
        %1012 = vmatpush2.msra.mxu0 0.0
        %1013 = vmatprep.subr.mxu0 0.0
        %1014 = vmatpush2.msra.mxu0 0.0
        %1015 = vmatprep.subr.mxu0 0.0
        %1016 = vmatpush2.msra.mxu0 0.0
        %1017 = vmatprep.subr.mxu0 0.0
        %1018 = vmatpush2.msra.mxu0 0.0
        %1019 = vmatprep.subr.mxu0 0.0
        %1020 = vmatpush2.msra.mxu0 0.0
        %1021 = vmatprep.subr.mxu0 0.0
        %1022 = vmatpush2.msra.mxu0 0.0
        %1023 = vmatprep.subr.mxu0 0.0
        %1024 = vmatpush2.msra.mxu0 0.0
        %1025 = vmatprep.subr.mxu0 0.0
        %1026 = vmatpush2.msra.mxu0 0.0
        %1027 = vmatprep.subr.mxu0 0.0
        %1028 = vmatpush2.msra.mxu0 0.0
        %1029 = vmatprep.subr.mxu0 0.0
        %1030 = vmatpush2.msra.mxu0 0.0
        %1031 = vmatprep.subr.mxu0 0.0
        %1032 = vmatpush2.msra.mxu0 0.0
        %1033 = vmatprep.subr.mxu0 0.0
        %1034 = vmatpush2.msra.mxu0 0.0
        %1035 = vmatprep.subr.mxu0 0.0
        %1036 = vmatpush2.msra.mxu0 0.0
        %1037 = vmatprep.subr.mxu0 0.0
        %1038 = vmatpush2.msra.mxu0 0.0
        %1039 = vmatprep.subr.mxu0 0.0
        %1040 = vmatpush2.msra.mxu0 0.0
        %1041 = vmatprep.mubr.f32.mxu0 0.0
        %1042 = vmatmul.mubr.f32.gmra.mxu0 %v774
        %v1043 = vpop.f32.mrf.mxu0
        %v1044 = vadd.f32 %v975, %v1043
        %v1045 = vpop.f32.mrf.mxu0
        %1046 = vmatprep.mubr.f32.mxu0 0.0
        %1047 = vmatmul.mubr.f32.gmra.mxu0 %v777
        %v1048 = vpop.f32.mrf.mxu0
        %v1049 = vadd.f32 %v975, %v1048
        %v1050 = vpop.f32.mrf.mxu0
        %1051 = vmatprep.mubr.f32.mxu0 0.0
        %1052 = vmatmul.mubr.f32.gmra.mxu0 %v780
        %v1053 = vpop.f32.mrf.mxu0
        %v1054 = vadd.f32 %v975, %v1053
        %v1055 = vpop.f32.mrf.mxu0
        %1056 = vmatprep.mubr.f32.mxu0 0.0
        %1057 = vmatmul.mubr.f32.gmra.mxu0 %v783
        %v1058 = vpop.f32.mrf.mxu0
        %v1059 = vadd.f32 %v975, %v1058
        %v1060 = vpop.f32.mrf.mxu0
        %1061 = vmatprep.mubr.f32.mxu0 0.0
        %1062 = vmatmul.mubr.f32.gmra.mxu0 %v786
        %v1063 = vpop.f32.mrf.mxu0
        %v1064 = vadd.f32 %v975, %v1063
        %v1065 = vpop.f32.mrf.mxu0
        %1066 = vmatprep.mubr.f32.mxu0 0.0
        %1067 = vmatmul.mubr.f32.gmra.mxu0 %v789
        %v1068 = vpop.f32.mrf.mxu0
        %v1069 = vadd.f32 %v975, %v1068
        %v1070 = vpop.f32.mrf.mxu0
        %1071 = vmatprep.mubr.f32.mxu0 0.0
        %1072 = vmatmul.mubr.f32.gmra.mxu0 %v792
        %v1073 = vpop.f32.mrf.mxu0
        %v1074 = vadd.f32 %v975, %v1073
        %v1075 = vpop.f32.mrf.mxu0
        %1076 = vmatprep.mubr.f32.mxu0 0.0
        %1077 = vmatmul.mubr.f32.gmra.mxu0 %v795
        %v1078 = vpop.f32.mrf.mxu0
        %v1079 = vadd.f32 %v975, %v1078
        %v1080 = vpop.f32.mrf.mxu0
        %1081 = vmatprep.mubr.f32.mxu0 0.0
        %1082 = vmatmul.mubr.f32.gmra.mxu0 %v798
        %v1083 = vpop.f32.mrf.mxu0
        %v1084 = vadd.f32 %v975, %v1083
        %v1085 = vpop.f32.mrf.mxu0
        %1086 = vmatprep.mubr.f32.mxu0 0.0
        %1087 = vmatmul.mubr.f32.gmra.mxu0 %v801
        %v1088 = vpop.f32.mrf.mxu0
        %v1089 = vadd.f32 %v975, %v1088
        %v1090 = vpop.f32.mrf.mxu0
        %1091 = vmatprep.mubr.f32.mxu0 0.0
        %1092 = vmatmul.mubr.f32.gmra.mxu0 %v804
        %v1093 = vpop.f32.mrf.mxu0
        %v1094 = vadd.f32 %v975, %v1093
        %v1095 = vpop.f32.mrf.mxu0
        %1096 = vmatprep.mubr.f32.mxu0 0.0
        %1097 = vmatmul.mubr.f32.gmra.mxu0 %v807
        %v1098 = vpop.f32.mrf.mxu0
        %v1099 = vadd.f32 %v975, %v1098
        %v1100 = vpop.f32.mrf.mxu0
        %1101 = vmatprep.mubr.f32.mxu0 0.0
        %1102 = vmatmul.mubr.f32.gmra.mxu0 %v810
        %v1103 = vpop.f32.mrf.mxu0
        %v1104 = vadd.f32 %v975, %v1103
        %v1105 = vpop.f32.mrf.mxu0
        %1106 = vmatprep.mubr.f32.mxu0 0.0
        %1107 = vmatmul.mubr.f32.gmra.mxu0 %v813
        %v1108 = vpop.f32.mrf.mxu0
        %v1109 = vadd.f32 %v975, %v1108
        %v1110 = vpop.f32.mrf.mxu0
        %1111 = vmatprep.mubr.f32.mxu0 0.0
        %1112 = vmatmul.mubr.f32.gmra.mxu0 %v816
        %v1113 = vpop.f32.mrf.mxu0
        %v1114 = vadd.f32 %v975, %v1113
        %v1115 = vpop.f32.mrf.mxu0
        %1116 = vmatprep.mubr.f32.mxu0 0.0
        %1117 = vmatmul.mubr.f32.gmra.mxu0 %v819
        %v1118 = vpop.f32.mrf.mxu0
        %v1119 = vadd.f32 %v975, %v1118
        %v1120 = vpop.f32.mrf.mxu0
        %1121 = vdwg.mxu0
        %v1122 = vmul.f32 %v888, 0.00390625
        %v1123 = vmul.f32 %v893, 0.00390625
        %v1124 = vmul.f32 %v898, 0.00390625
        %v1125 = vmul.f32 %v903, 0.00390625
        %v1126 = vmul.f32 %v908, 0.00390625
        %v1127 = vmul.f32 %v913, 0.00390625
        %v1128 = vmul.f32 %v918, 0.00390625
        %v1129 = vmul.f32 %v923, 0.00390625
        %v1130 = vmul.f32 %v928, 0.00390625
        %v1131 = vmul.f32 %v933, 0.00390625
        %v1132 = vmul.f32 %v938, 0.00390625
        %v1133 = vmul.f32 %v943, 0.00390625
        %v1134 = vmul.f32 %v948, 0.00390625
        %v1135 = vmul.f32 %v953, 0.00390625
        %v1136 = vmul.f32 %v958, 0.00390625
        %v1137 = vmul.f32 %v963, 0.00390625
        %v1139 = vsel %vm378, %v1122, 0
        %v1142 = vsel %vm378, %v1123, 0
        %v1145 = vsel %vm378, %v1124, 0
        %v1148 = vsel %vm378, %v1125, 0
        %v1151 = vsel %vm378, %v1126, 0
        %v1154 = vsel %vm378, %v1127, 0
        %v1157 = vsel %vm378, %v1128, 0
        %v1160 = vsel %vm378, %v1129, 0
        %v1163 = vsel %vm378, %v1130, 0
        %v1166 = vsel %vm378, %v1131, 0
        %v1169 = vsel %vm378, %v1132, 0
        %v1172 = vsel %vm378, %v1133, 0
        %v1175 = vsel %vm378, %v1134, 0
        %v1178 = vsel %vm378, %v1135, 0
        %v1181 = vsel %vm378, %v1136, 0
        %v1184 = vsel %vm378, %v1137, 0
        %v1187 = vsel %vm378, %v1044, 0
        %v1190 = vsel %vm378, %v1049, 0
        %v1193 = vsel %vm378, %v1054, 0
        %v1196 = vsel %vm378, %v1059, 0
        %v1199 = vsel %vm378, %v1064, 0
        %v1202 = vsel %vm378, %v1069, 0
        %v1205 = vsel %vm378, %v1074, 0
        %v1208 = vsel %vm378, %v1079, 0
        %v1211 = vsel %vm378, %v1084, 0
        %v1214 = vsel %vm378, %v1089, 0
        %v1217 = vsel %vm378, %v1094, 0
        %v1220 = vsel %vm378, %v1099, 0
        %v1223 = vsel %vm378, %v1104, 0
        %v1226 = vsel %vm378, %v1109, 0
        %v1229 = vsel %vm378, %v1114, 0
        %v1232 = vsel %vm378, %v1119, 0
        %1234 = vmatprep.subr.mxu0 0.0
        %1235 = vmatpush1.xpose.msra.mxu0 %v1232
        %1236 = vmatprep.subr.mxu0 0.0
        %1237 = vmatpush1.xpose.msra.mxu0 %v1229
        %1238 = vmatprep.subr.mxu0 0.0
        %1239 = vmatpush1.xpose.msra.mxu0 %v1226
        %1240 = vmatprep.subr.mxu0 0.0
        %1241 = vmatpush1.xpose.msra.mxu0 %v1223
        %1242 = vmatprep.subr.mxu0 0.0
        %1243 = vmatpush1.xpose.msra.mxu0 %v1220
        %1244 = vmatprep.subr.mxu0 0.0
        %1245 = vmatpush1.xpose.msra.mxu0 %v1217
        %1246 = vmatprep.subr.mxu0 0.0
        %1247 = vmatpush1.xpose.msra.mxu0 %v1214
        %1248 = vmatprep.subr.mxu0 0.0
        %1249 = vmatpush1.xpose.msra.mxu0 %v1211
        %1250 = vmatprep.subr.mxu0 0.0
        %1251 = vmatpush1.xpose.msra.mxu0 %v1208
        %1252 = vmatprep.subr.mxu0 0.0
        %1253 = vmatpush1.xpose.msra.mxu0 %v1205
        %1254 = vmatprep.subr.mxu0 0.0
        %1255 = vmatpush1.xpose.msra.mxu0 %v1202
        %1256 = vmatprep.subr.mxu0 0.0
        %1257 = vmatpush1.xpose.msra.mxu0 %v1199
        %1258 = vmatprep.subr.mxu0 0.0
        %1259 = vmatpush1.xpose.msra.mxu0 %v1196
        %1260 = vmatprep.subr.mxu0 0.0
        %1261 = vmatpush1.xpose.msra.mxu0 %v1193
        %1262 = vmatprep.subr.mxu0 0.0
        %1263 = vmatpush1.xpose.msra.mxu0 %v1190
        %1264 = vmatprep.subr.mxu0 0.0
        %1265 = vmatpush1.xpose.msra.mxu0 %v1187
        %1266 = vmatprep.subr.mxu0 0.0
        %1267 = vmatpush2.xpose.msra.mxu0 0.0
        %1268 = vmatprep.subr.mxu0 0.0
        %1269 = vmatpush2.xpose.msra.mxu0 0.0
        %1270 = vmatprep.subr.mxu0 0.0
        %1271 = vmatpush2.xpose.msra.mxu0 0.0
        %1272 = vmatprep.subr.mxu0 0.0
        %1273 = vmatpush2.xpose.msra.mxu0 0.0
        %1274 = vmatprep.subr.mxu0 0.0
        %1275 = vmatpush2.xpose.msra.mxu0 0.0
        %1276 = vmatprep.subr.mxu0 0.0
        %1277 = vmatpush2.xpose.msra.mxu0 0.0
        %1278 = vmatprep.subr.mxu0 0.0
        %1279 = vmatpush2.xpose.msra.mxu0 0.0
        %1280 = vmatprep.subr.mxu0 0.0
        %1281 = vmatpush2.xpose.msra.mxu0 0.0
        %1282 = vmatprep.subr.mxu0 0.0
        %1283 = vmatpush2.xpose.msra.mxu0 0.0
        %1284 = vmatprep.subr.mxu0 0.0
        %1285 = vmatpush2.xpose.msra.mxu0 0.0
        %1286 = vmatprep.subr.mxu0 0.0
        %1287 = vmatpush2.xpose.msra.mxu0 0.0
        %1288 = vmatprep.subr.mxu0 0.0
        %1289 = vmatpush2.xpose.msra.mxu0 0.0
        %1290 = vmatprep.subr.mxu0 0.0
        %1291 = vmatpush2.xpose.msra.mxu0 0.0
        %1292 = vmatprep.subr.mxu0 0.0
        %1293 = vmatpush2.xpose.msra.mxu0 0.0
        %1294 = vmatprep.subr.mxu0 0.0
        %1295 = vmatpush2.xpose.msra.mxu0 0.0
        %1296 = vmatprep.subr.mxu0 0.0
        %1297 = vmatpush2.xpose.msra.mxu0 0.0
        %1298 = vmatprep.mubr.f32.mxu0 0.0
        %1299 = vmatmul.mubr.f32.gmra.mxu0 %v1139
        %v1300 = vpop.f32.mrf.mxu0
        %v1301 = vadd.f32 0.0, %v1300
        %v1302 = vpop.f32.mrf.mxu0
        %1303 = vmatprep.mubr.f32.mxu0 0.0
        %1304 = vmatmul.mubr.f32.gmra.mxu0 %v1142
        %v1305 = vpop.f32.mrf.mxu0
        %v1306 = vadd.f32 0.0, %v1305
        %v1307 = vpop.f32.mrf.mxu0
        %1308 = vmatprep.mubr.f32.mxu0 0.0
        %1309 = vmatmul.mubr.f32.gmra.mxu0 %v1145
        %v1310 = vpop.f32.mrf.mxu0
        %v1311 = vadd.f32 0.0, %v1310
        %v1312 = vpop.f32.mrf.mxu0
        %1313 = vmatprep.mubr.f32.mxu0 0.0
        %1314 = vmatmul.mubr.f32.gmra.mxu0 %v1148
        %v1315 = vpop.f32.mrf.mxu0
        %v1316 = vadd.f32 0.0, %v1315
        %v1317 = vpop.f32.mrf.mxu0
        %1318 = vmatprep.mubr.f32.mxu0 0.0
        %1319 = vmatmul.mubr.f32.gmra.mxu0 %v1151
        %v1320 = vpop.f32.mrf.mxu0
        %v1321 = vadd.f32 0.0, %v1320
        %v1322 = vpop.f32.mrf.mxu0
        %1323 = vmatprep.mubr.f32.mxu0 0.0
        %1324 = vmatmul.mubr.f32.gmra.mxu0 %v1154
        %v1325 = vpop.f32.mrf.mxu0
        %v1326 = vadd.f32 0.0, %v1325
        %v1327 = vpop.f32.mrf.mxu0
        %1328 = vmatprep.mubr.f32.mxu0 0.0
        %1329 = vmatmul.mubr.f32.gmra.mxu0 %v1157
        %v1330 = vpop.f32.mrf.mxu0
        %v1331 = vadd.f32 0.0, %v1330
        %v1332 = vpop.f32.mrf.mxu0
        %1333 = vmatprep.mubr.f32.mxu0 0.0
        %1334 = vmatmul.mubr.f32.gmra.mxu0 %v1160
        %v1335 = vpop.f32.mrf.mxu0
        %v1336 = vadd.f32 0.0, %v1335
        %v1337 = vpop.f32.mrf.mxu0
        %1338 = vmatprep.mubr.f32.mxu0 0.0
        %1339 = vmatmul.mubr.f32.gmra.mxu0 %v1163
        %v1340 = vpop.f32.mrf.mxu0
        %v1341 = vadd.f32 0.0, %v1340
        %v1342 = vpop.f32.mrf.mxu0
        %1343 = vmatprep.mubr.f32.mxu0 0.0
        %1344 = vmatmul.mubr.f32.gmra.mxu0 %v1166
        %v1345 = vpop.f32.mrf.mxu0
        %v1346 = vadd.f32 0.0, %v1345
        %v1347 = vpop.f32.mrf.mxu0
        %1348 = vmatprep.mubr.f32.mxu0 0.0
        %1349 = vmatmul.mubr.f32.gmra.mxu0 %v1169
        %v1350 = vpop.f32.mrf.mxu0
        %v1351 = vadd.f32 0.0, %v1350
        %v1352 = vpop.f32.mrf.mxu0
        %1353 = vmatprep.mubr.f32.mxu0 0.0
        %1354 = vmatmul.mubr.f32.gmra.mxu0 %v1172
        %v1355 = vpop.f32.mrf.mxu0
        %v1356 = vadd.f32 0.0, %v1355
        %v1357 = vpop.f32.mrf.mxu0
        %1358 = vmatprep.mubr.f32.mxu0 0.0
        %1359 = vmatmul.mubr.f32.gmra.mxu0 %v1175
        %v1360 = vpop.f32.mrf.mxu0
        %v1361 = vadd.f32 0.0, %v1360
        %v1362 = vpop.f32.mrf.mxu0
        %1363 = vmatprep.mubr.f32.mxu0 0.0
        %1364 = vmatmul.mubr.f32.gmra.mxu0 %v1178
        %v1365 = vpop.f32.mrf.mxu0
        %v1366 = vadd.f32 0.0, %v1365
        %v1367 = vpop.f32.mrf.mxu0
        %1368 = vmatprep.mubr.f32.mxu0 0.0
        %1369 = vmatmul.mubr.f32.gmra.mxu0 %v1181
        %v1370 = vpop.f32.mrf.mxu0
        %v1371 = vadd.f32 0.0, %v1370
        %v1372 = vpop.f32.mrf.mxu0
        %1373 = vmatprep.mubr.f32.mxu0 0.0
        %1374 = vmatmul.mubr.f32.gmra.mxu0 %v1184
        %v1375 = vpop.f32.mrf.mxu0
        %v1376 = vadd.f32 0.0, %v1375
        %v1377 = vpop.f32.mrf.mxu0
        %1378 = vdwg.mxu0
        %v1379 = vlaneseq
        %v1380 = vshrl.u32 %v1379, 7
        %v1381 = vadd.s32 %v1380, 8
        %v1382 = vadd.s32 %v1380, 16
        %v1383 = vadd.s32 %v1380, 24
        %v1384 = vadd.s32 %v1380, 32
        %v1385 = vadd.s32 %v1380, 40
        %v1386 = vadd.s32 %v1380, 48
        %v1387 = vadd.s32 %v1380, 56
        %v1388 = vadd.s32 %v1380, 64
        %v1389 = vadd.s32 %v1380, 72
        %v1390 = vadd.s32 %v1380, 80
        %v1391 = vadd.s32 %v1380, 88
        %v1392 = vadd.s32 %v1380, 96
        %v1393 = vadd.s32 %v1380, 104
        %v1394 = vadd.s32 %v1380, 112
        %v1395 = vadd.s32 %v1380, 120
        %v1396 = vlaneseq
        %v1397 = vand.u32 %v1396, 127
        %v1398 = vsub.s32 %v1397, %v1380
        %v1399 = vsub.s32 %v1397, %v1381
        %v1400 = vsub.s32 %v1397, %v1382
        %v1401 = vsub.s32 %v1397, %v1383
        %v1402 = vsub.s32 %v1397, %v1384
        %v1403 = vsub.s32 %v1397, %v1385
        %v1404 = vsub.s32 %v1397, %v1386
        %v1405 = vsub.s32 %v1397, %v1387
        %v1406 = vsub.s32 %v1397, %v1388
        %v1407 = vsub.s32 %v1397, %v1389
        %v1408 = vsub.s32 %v1397, %v1390
        %v1409 = vsub.s32 %v1397, %v1391
        %v1410 = vsub.s32 %v1397, %v1392
        %v1411 = vsub.s32 %v1397, %v1393
        %v1412 = vsub.s32 %v1397, %v1394
        %v1413 = vsub.s32 %v1397, %v1395
        %v1414 = vld [vmem:[%s361] sm:$0xff]
        %v1415 = vld [vmem:[%s361 + $0x8] sm:$0xff]
        %v1416 = vld [vmem:[%s361 + $0x10] sm:$0xff]
        %v1417 = vld [vmem:[%s361 + $0x18] sm:$0xff]
        %v1418 = vld [vmem:[%s361 + $0x20] sm:$0xff]
        %v1419 = vld [vmem:[%s361 + $0x28] sm:$0xff]
        %v1420 = vld [vmem:[%s361 + $0x30] sm:$0xff]
        %v1421 = vld [vmem:[%s361 + $0x38] sm:$0xff]
        %v1422 = vld [vmem:[%s361 + $0x40] sm:$0xff]
        %v1423 = vld [vmem:[%s361 + $0x48] sm:$0xff]
        %v1424 = vld [vmem:[%s361 + $0x50] sm:$0xff]
        %v1425 = vld [vmem:[%s361 + $0x58] sm:$0xff]
        %v1426 = vld [vmem:[%s361 + $0x60] sm:$0xff]
        %v1427 = vld [vmem:[%s361 + $0x68] sm:$0xff]
        %v1428 = vld [vmem:[%s361 + $0x70] sm:$0xff]
        %v1429 = vld [vmem:[%s361 + $0x78] sm:$0xff]
        %vm1430 = vcmp.ne.s32.totalorder %v1414, 0
        %vm1431 = vcmp.ne.s32.totalorder %v1415, 0
        %vm1432 = vcmp.ne.s32.totalorder %v1416, 0
        %vm1433 = vcmp.ne.s32.totalorder %v1417, 0
        %vm1434 = vcmp.ne.s32.totalorder %v1418, 0
        %vm1435 = vcmp.ne.s32.totalorder %v1419, 0
        %vm1436 = vcmp.ne.s32.totalorder %v1420, 0
        %vm1437 = vcmp.ne.s32.totalorder %v1421, 0
        %vm1438 = vcmp.ne.s32.totalorder %v1422, 0
        %vm1439 = vcmp.ne.s32.totalorder %v1423, 0
        %vm1440 = vcmp.ne.s32.totalorder %v1424, 0
        %vm1441 = vcmp.ne.s32.totalorder %v1425, 0
        %vm1442 = vcmp.ne.s32.totalorder %v1426, 0
        %vm1443 = vcmp.ne.s32.totalorder %v1427, 0
        %vm1444 = vcmp.ne.s32.totalorder %v1428, 0
        %vm1445 = vcmp.ne.s32.totalorder %v1429, 0
        %vm1446 = vcmp.eq.s32.totalorder %v1398, 1
        %vm1447 = vcmp.eq.s32.totalorder %v1399, 1
        %vm1448 = vcmp.eq.s32.totalorder %v1400, 1
        %vm1449 = vcmp.eq.s32.totalorder %v1401, 1
        %vm1450 = vcmp.eq.s32.totalorder %v1402, 1
        %vm1451 = vcmp.eq.s32.totalorder %v1403, 1
        %vm1452 = vcmp.eq.s32.totalorder %v1404, 1
        %vm1453 = vcmp.eq.s32.totalorder %v1405, 1
        %vm1454 = vcmp.eq.s32.totalorder %v1406, 1
        %vm1455 = vcmp.eq.s32.totalorder %v1407, 1
        %vm1456 = vcmp.eq.s32.totalorder %v1408, 1
        %vm1457 = vcmp.eq.s32.totalorder %v1409, 1
        %vm1458 = vcmp.eq.s32.totalorder %v1410, 1
        %vm1459 = vcmp.eq.s32.totalorder %v1411, 1
        %vm1460 = vcmp.eq.s32.totalorder %v1412, 1
        %vm1461 = vcmp.eq.s32.totalorder %v1413, 1
        %vm1462 = vcmp.eq.s32.totalorder %v1398, 4294967295
        %vm1463 = vcmp.eq.s32.totalorder %v1399, 4294967295
        %vm1464 = vcmp.eq.s32.totalorder %v1400, 4294967295
        %vm1465 = vcmp.eq.s32.totalorder %v1401, 4294967295
        %vm1466 = vcmp.eq.s32.totalorder %v1402, 4294967295
        %vm1467 = vcmp.eq.s32.totalorder %v1403, 4294967295
        %vm1468 = vcmp.eq.s32.totalorder %v1404, 4294967295
        %vm1469 = vcmp.eq.s32.totalorder %v1405, 4294967295
        %vm1470 = vcmp.eq.s32.totalorder %v1406, 4294967295
        %vm1471 = vcmp.eq.s32.totalorder %v1407, 4294967295
        %vm1472 = vcmp.eq.s32.totalorder %v1408, 4294967295
        %vm1473 = vcmp.eq.s32.totalorder %v1409, 4294967295
        %vm1474 = vcmp.eq.s32.totalorder %v1410, 4294967295
        %vm1475 = vcmp.eq.s32.totalorder %v1411, 4294967295
        %vm1476 = vcmp.eq.s32.totalorder %v1412, 4294967295
        %vm1477 = vcmp.eq.s32.totalorder %v1413, 4294967295
        %vm1478 = vmor %vm1446, %vm1462
        %vm1479 = vmor %vm1447, %vm1463
        %vm1480 = vmor %vm1448, %vm1464
        %vm1481 = vmor %vm1449, %vm1465
        %vm1482 = vmor %vm1450, %vm1466
        %vm1483 = vmor %vm1451, %vm1467
        %vm1484 = vmor %vm1452, %vm1468
        %vm1485 = vmor %vm1453, %vm1469
        %vm1486 = vmor %vm1454, %vm1470
        %vm1487 = vmor %vm1455, %vm1471
        %vm1488 = vmor %vm1456, %vm1472
        %vm1489 = vmor %vm1457, %vm1473
        %vm1490 = vmor %vm1458, %vm1474
        %vm1491 = vmor %vm1459, %vm1475
        %vm1492 = vmor %vm1460, %vm1476
        %vm1493 = vmor %vm1461, %vm1477
        %v1494 = vsel %vm1430, 1, 0
        %v1495 = vsel %vm1431, 1, 0
        %v1496 = vsel %vm1432, 1, 0
        %v1497 = vsel %vm1433, 1, 0
        %v1498 = vsel %vm1434, 1, 0
        %v1499 = vsel %vm1435, 1, 0
        %v1500 = vsel %vm1436, 1, 0
        %v1501 = vsel %vm1437, 1, 0
        %v1502 = vsel %vm1438, 1, 0
        %v1503 = vsel %vm1439, 1, 0
        %v1504 = vsel %vm1440, 1, 0
        %v1505 = vsel %vm1441, 1, 0
        %v1506 = vsel %vm1442, 1, 0
        %v1507 = vsel %vm1443, 1, 0
        %v1508 = vsel %vm1444, 1, 0
        %v1509 = vsel %vm1445, 1, 0
        %1510 = vset.pattern.permute.xlu0 0
        %1511 = vperm.xlu0 %1510, %v1494
        %v1512 = vpop.permute.xlu0 %1511
        %1513 = vset.pattern.permute.xlu0 0
        %1514 = vperm.xlu0 %1513, %v1495
        %v1515 = vpop.permute.xlu0 %1514
        %1516 = vset.pattern.permute.xlu0 0
        %1517 = vperm.xlu0 %1516, %v1496
        %v1518 = vpop.permute.xlu0 %1517
        %1519 = vset.pattern.permute.xlu0 0
        %1520 = vperm.xlu0 %1519, %v1497
        %v1521 = vpop.permute.xlu0 %1520
        %1522 = vset.pattern.permute.xlu0 0
        %1523 = vperm.xlu0 %1522, %v1498
        %v1524 = vpop.permute.xlu0 %1523
        %1525 = vset.pattern.permute.xlu0 0
        %1526 = vperm.xlu0 %1525, %v1499
        %v1527 = vpop.permute.xlu0 %1526
        %1528 = vset.pattern.permute.xlu0 0
        %1529 = vperm.xlu0 %1528, %v1500
        %v1530 = vpop.permute.xlu0 %1529
        %1531 = vset.pattern.permute.xlu0 0
        %1532 = vperm.xlu0 %1531, %v1501
        %v1533 = vpop.permute.xlu0 %1532
        %1534 = vset.pattern.permute.xlu0 0
        %1535 = vperm.xlu0 %1534, %v1502
        %v1536 = vpop.permute.xlu0 %1535
        %1537 = vset.pattern.permute.xlu0 0
        %1538 = vperm.xlu0 %1537, %v1503
        %v1539 = vpop.permute.xlu0 %1538
        %1540 = vset.pattern.permute.xlu0 0
        %1541 = vperm.xlu0 %1540, %v1504
        %v1542 = vpop.permute.xlu0 %1541
        %1543 = vset.pattern.permute.xlu0 0
        %1544 = vperm.xlu0 %1543, %v1505
        %v1545 = vpop.permute.xlu0 %1544
        %1546 = vset.pattern.permute.xlu0 0
        %1547 = vperm.xlu0 %1546, %v1506
        %v1548 = vpop.permute.xlu0 %1547
        %1549 = vset.pattern.permute.xlu0 0
        %1550 = vperm.xlu0 %1549, %v1507
        %v1551 = vpop.permute.xlu0 %1550
        %1552 = vset.pattern.permute.xlu0 0
        %1553 = vperm.xlu0 %1552, %v1508
        %v1554 = vpop.permute.xlu0 %1553
        %1555 = vset.pattern.permute.xlu0 0
        %1556 = vperm.xlu0 %1555, %v1509
        %v1557 = vpop.permute.xlu0 %1556
        %vm1558 = vcmp.eq.s32.totalorder %v1512, 1
        %vm1559 = vcmp.eq.s32.totalorder %v1515, 1
        %vm1560 = vcmp.eq.s32.totalorder %v1518, 1
        %vm1561 = vcmp.eq.s32.totalorder %v1521, 1
        %vm1562 = vcmp.eq.s32.totalorder %v1524, 1
        %vm1563 = vcmp.eq.s32.totalorder %v1527, 1
        %vm1564 = vcmp.eq.s32.totalorder %v1530, 1
        %vm1565 = vcmp.eq.s32.totalorder %v1533, 1
        %vm1566 = vcmp.eq.s32.totalorder %v1536, 1
        %vm1567 = vcmp.eq.s32.totalorder %v1539, 1
        %vm1568 = vcmp.eq.s32.totalorder %v1542, 1
        %vm1569 = vcmp.eq.s32.totalorder %v1545, 1
        %vm1570 = vcmp.eq.s32.totalorder %v1548, 1
        %vm1571 = vcmp.eq.s32.totalorder %v1551, 1
        %vm1572 = vcmp.eq.s32.totalorder %v1554, 1
        %vm1573 = vcmp.eq.s32.totalorder %v1557, 1
        %vm1574 = vmand %vm1558, %vm1478
        %vm1575 = vmand %vm1559, %vm1479
        %vm1576 = vmand %vm1560, %vm1480
        %vm1577 = vmand %vm1561, %vm1481
        %vm1578 = vmand %vm1562, %vm1482
        %vm1579 = vmand %vm1563, %vm1483
        %vm1580 = vmand %vm1564, %vm1484
        %vm1581 = vmand %vm1565, %vm1485
        %vm1582 = vmand %vm1566, %vm1486
        %vm1583 = vmand %vm1567, %vm1487
        %vm1584 = vmand %vm1568, %vm1488
        %vm1585 = vmand %vm1569, %vm1489
        %vm1586 = vmand %vm1570, %vm1490
        %vm1587 = vmand %vm1571, %vm1491
        %vm1588 = vmand %vm1572, %vm1492
        %vm1589 = vmand %vm1573, %vm1493
        %v1590 = vsel %vm1574, %v1301, -1e+09
        %v1591 = vsel %vm1575, %v1306, -1e+09
        %v1592 = vsel %vm1576, %v1311, -1e+09
        %v1593 = vsel %vm1577, %v1316, -1e+09
        %v1594 = vsel %vm1578, %v1321, -1e+09
        %v1595 = vsel %vm1579, %v1326, -1e+09
        %v1596 = vsel %vm1580, %v1331, -1e+09
        %v1597 = vsel %vm1581, %v1336, -1e+09
        %v1598 = vsel %vm1582, %v1341, -1e+09
        %v1599 = vsel %vm1583, %v1346, -1e+09
        %v1600 = vsel %vm1584, %v1351, -1e+09
        %v1601 = vsel %vm1585, %v1356, -1e+09
        %v1602 = vsel %vm1586, %v1361, -1e+09
        %v1603 = vsel %vm1587, %v1366, -1e+09
        %v1604 = vsel %vm1588, %v1371, -1e+09
        %v1605 = vsel %vm1589, %v1376, -1e+09
        %vm1606 = vcmp.lt.s32.totalorder %v1397, 8
        %v1607 = vsel %vm1606, %v1590, -inf
        %v1608 = vsel %vm1606, %v1591, -inf
        %v1609 = vsel %vm1606, %v1592, -inf
        %v1610 = vsel %vm1606, %v1593, -inf
        %v1611 = vsel %vm1606, %v1594, -inf
        %v1612 = vsel %vm1606, %v1595, -inf
        %v1613 = vsel %vm1606, %v1596, -inf
        %v1614 = vsel %vm1606, %v1597, -inf
        %v1615 = vsel %vm1606, %v1598, -inf
        %v1616 = vsel %vm1606, %v1599, -inf
        %v1617 = vsel %vm1606, %v1600, -inf
        %v1618 = vsel %vm1606, %v1601, -inf
        %v1619 = vsel %vm1606, %v1602, -inf
        %v1620 = vsel %vm1606, %v1603, -inf
        %v1621 = vsel %vm1606, %v1604, -inf
        %v1622 = vsel %vm1606, %v1605, -inf
        %1623 = vmax.xlane.f32.xlu0 %v1607
        %v1624 = vpop.xlane.xlu0 %1623
        %1625 = vmax.xlane.f32.xlu0 %v1608
        %v1626 = vpop.xlane.xlu0 %1625
        %1627 = vmax.xlane.f32.xlu0 %v1609
        %v1628 = vpop.xlane.xlu0 %1627
        %1629 = vmax.xlane.f32.xlu0 %v1610
        %v1630 = vpop.xlane.xlu0 %1629
        %1631 = vmax.xlane.f32.xlu0 %v1611
        %v1632 = vpop.xlane.xlu0 %1631
        %1633 = vmax.xlane.f32.xlu0 %v1612
        %v1634 = vpop.xlane.xlu0 %1633
        %1635 = vmax.xlane.f32.xlu0 %v1613
        %v1636 = vpop.xlane.xlu0 %1635
        %1637 = vmax.xlane.f32.xlu0 %v1614
        %v1638 = vpop.xlane.xlu0 %1637
        %1639 = vmax.xlane.f32.xlu0 %v1615
        %v1640 = vpop.xlane.xlu0 %1639
        %1641 = vmax.xlane.f32.xlu0 %v1616
        %v1642 = vpop.xlane.xlu0 %1641
        %1643 = vmax.xlane.f32.xlu0 %v1617
        %v1644 = vpop.xlane.xlu0 %1643
        %1645 = vmax.xlane.f32.xlu0 %v1618
        %v1646 = vpop.xlane.xlu0 %1645
        %1647 = vmax.xlane.f32.xlu0 %v1619
        %v1648 = vpop.xlane.xlu0 %1647
        %1649 = vmax.xlane.f32.xlu0 %v1620
        %v1650 = vpop.xlane.xlu0 %1649
        %1651 = vmax.xlane.f32.xlu0 %v1621
        %v1652 = vpop.xlane.xlu0 %1651
        %1653 = vmax.xlane.f32.xlu0 %v1622
        %v1654 = vpop.xlane.xlu0 %1653
        %v1655 = vsub.f32 %v1607, %v1624
        %v1656 = vsub.f32 %v1608, %v1626
        %v1657 = vsub.f32 %v1609, %v1628
        %v1658 = vsub.f32 %v1610, %v1630
        %v1659 = vsub.f32 %v1611, %v1632
        %v1660 = vsub.f32 %v1612, %v1634
        %v1661 = vsub.f32 %v1613, %v1636
        %v1662 = vsub.f32 %v1614, %v1638
        %v1663 = vsub.f32 %v1615, %v1640
        %v1664 = vsub.f32 %v1616, %v1642
        %v1665 = vsub.f32 %v1617, %v1644
        %v1666 = vsub.f32 %v1618, %v1646
        %v1667 = vsub.f32 %v1619, %v1648
        %v1668 = vsub.f32 %v1620, %v1650
        %v1669 = vsub.f32 %v1621, %v1652
        %v1670 = vsub.f32 %v1622, %v1654
        %v1671 = vmul.f32 %v1655, 1.442695
        %v1672 = vpow.pop %v1671
        %v1673 = vmul.f32 %v1656, 1.442695
        %v1674 = vpow.pop %v1673
        %v1675 = vmul.f32 %v1657, 1.442695
        %v1676 = vpow.pop %v1675
        %v1677 = vmul.f32 %v1658, 1.442695
        %v1678 = vpow.pop %v1677
        %v1679 = vmul.f32 %v1659, 1.442695
        %v1680 = vpow.pop %v1679
        %v1681 = vmul.f32 %v1660, 1.442695
        %v1682 = vpow.pop %v1681
        %v1683 = vmul.f32 %v1661, 1.442695
        %v1684 = vpow.pop %v1683
        %v1685 = vmul.f32 %v1662, 1.442695
        %v1686 = vpow.pop %v1685
        %v1687 = vmul.f32 %v1663, 1.442695
        %v1688 = vpow.pop %v1687
        %v1689 = vmul.f32 %v1664, 1.442695
        %v1690 = vpow.pop %v1689
        %v1691 = vmul.f32 %v1665, 1.442695
        %v1692 = vpow.pop %v1691
        %v1693 = vmul.f32 %v1666, 1.442695
        %v1694 = vpow.pop %v1693
        %v1695 = vmul.f32 %v1667, 1.442695
        %v1696 = vpow.pop %v1695
        %v1697 = vmul.f32 %v1668, 1.442695
        %v1698 = vpow.pop %v1697
        %v1699 = vmul.f32 %v1669, 1.442695
        %v1700 = vpow.pop %v1699
        %v1701 = vmul.f32 %v1670, 1.442695
        %v1702 = vpow.pop %v1701
        %1703 = vadd.xlane.f32.xlu0 %v1672
        %v1704 = vpop.xlane.xlu0 %1703
        %1705 = vadd.xlane.f32.xlu0 %v1674
        %v1706 = vpop.xlane.xlu0 %1705
        %1707 = vadd.xlane.f32.xlu0 %v1676
        %v1708 = vpop.xlane.xlu0 %1707
        %1709 = vadd.xlane.f32.xlu0 %v1678
        %v1710 = vpop.xlane.xlu0 %1709
        %1711 = vadd.xlane.f32.xlu0 %v1680
        %v1712 = vpop.xlane.xlu0 %1711
        %1713 = vadd.xlane.f32.xlu0 %v1682
        %v1714 = vpop.xlane.xlu0 %1713
        %1715 = vadd.xlane.f32.xlu0 %v1684
        %v1716 = vpop.xlane.xlu0 %1715
        %1717 = vadd.xlane.f32.xlu0 %v1686
        %v1718 = vpop.xlane.xlu0 %1717
        %1719 = vadd.xlane.f32.xlu0 %v1688
        %v1720 = vpop.xlane.xlu0 %1719
        %1721 = vadd.xlane.f32.xlu0 %v1690
        %v1722 = vpop.xlane.xlu0 %1721
        %1723 = vadd.xlane.f32.xlu0 %v1692
        %v1724 = vpop.xlane.xlu0 %1723
        %1725 = vadd.xlane.f32.xlu0 %v1694
        %v1726 = vpop.xlane.xlu0 %1725
        %1727 = vadd.xlane.f32.xlu0 %v1696
        %v1728 = vpop.xlane.xlu0 %1727
        %1729 = vadd.xlane.f32.xlu0 %v1698
        %v1730 = vpop.xlane.xlu0 %1729
        %1731 = vadd.xlane.f32.xlu0 %v1700
        %v1732 = vpop.xlane.xlu0 %1731
        %1733 = vadd.xlane.f32.xlu0 %v1702
        %v1734 = vpop.xlane.xlu0 %1733
        %v1735 = vrcp.pop %v1704
        %v1736 = vmul.f32 1.0, %v1735
        %v1737 = vrcp.pop %v1706
        %v1738 = vmul.f32 1.0, %v1737
        %v1739 = vrcp.pop %v1708
        %v1740 = vmul.f32 1.0, %v1739
        %v1741 = vrcp.pop %v1710
        %v1742 = vmul.f32 1.0, %v1741
        %v1743 = vrcp.pop %v1712
        %v1744 = vmul.f32 1.0, %v1743
        %v1745 = vrcp.pop %v1714
        %v1746 = vmul.f32 1.0, %v1745
        %v1747 = vrcp.pop %v1716
        %v1748 = vmul.f32 1.0, %v1747
        %v1749 = vrcp.pop %v1718
        %v1750 = vmul.f32 1.0, %v1749
        %v1751 = vrcp.pop %v1720
        %v1752 = vmul.f32 1.0, %v1751
        %v1753 = vrcp.pop %v1722
        %v1754 = vmul.f32 1.0, %v1753
        %v1755 = vrcp.pop %v1724
        %v1756 = vmul.f32 1.0, %v1755
        %v1757 = vrcp.pop %v1726
        %v1758 = vmul.f32 1.0, %v1757
        %v1759 = vrcp.pop %v1728
        %v1760 = vmul.f32 1.0, %v1759
        %v1761 = vrcp.pop %v1730
        %v1762 = vmul.f32 1.0, %v1761
        %v1763 = vrcp.pop %v1732
        %v1764 = vmul.f32 1.0, %v1763
        %v1765 = vrcp.pop %v1734
        %v1766 = vmul.f32 1.0, %v1765
        %v1767 = vmul.f32 %v1672, %v1736
        %v1768 = vmul.f32 %v1674, %v1738
        %v1769 = vmul.f32 %v1676, %v1740
        %v1770 = vmul.f32 %v1678, %v1742
        %v1771 = vmul.f32 %v1680, %v1744
        %v1772 = vmul.f32 %v1682, %v1746
        %v1773 = vmul.f32 %v1684, %v1748
        %v1774 = vmul.f32 %v1686, %v1750
        %v1775 = vmul.f32 %v1688, %v1752
        %v1776 = vmul.f32 %v1690, %v1754
        %v1777 = vmul.f32 %v1692, %v1756
        %v1778 = vmul.f32 %v1694, %v1758
        %v1779 = vmul.f32 %v1696, %v1760
        %v1780 = vmul.f32 %v1698, %v1762
        %v1781 = vmul.f32 %v1700, %v1764
        %v1782 = vmul.f32 %v1702, %v1766
        %1783 = vxpose.xlu0.b32.start [1/16] %v1767, 128
        %1784 = vxpose.xlu0.b32.cont [2/16] %v1768, 128
        %1785 = vxpose.xlu0.b32.cont [3/16] %v1769, 128
        %1786 = vxpose.xlu0.b32.cont [4/16] %v1770, 128
        %1787 = vxpose.xlu0.b32.cont [5/16] %v1771, 128
        %1788 = vxpose.xlu0.b32.cont [6/16] %v1772, 128
        %1789 = vxpose.xlu0.b32.cont [7/16] %v1773, 128
        %1790 = vxpose.xlu0.b32.cont [8/16] %v1774, 128
        %1791 = vxpose.xlu0.b32.cont [9/16] %v1775, 128
        %1792 = vxpose.xlu0.b32.cont [10/16] %v1776, 128
        %1793 = vxpose.xlu0.b32.cont [11/16] %v1777, 128
        %1794 = vxpose.xlu0.b32.cont [12/16] %v1778, 128
        %1795 = vxpose.xlu0.b32.cont [13/16] %v1779, 128
        %1796 = vxpose.xlu0.b32.cont [14/16] %v1780, 128
        %1797 = vxpose.xlu0.b32.cont [15/16] %v1781, 128
        %1798 = vxpose.xlu0.b32.end [16/16] %v1782, 128
        %v1799 = vpop.trf.xlu0
        %v1800 = vpop.trf.xlu0
        %v1801 = vpop.trf.xlu0
        %v1802 = vpop.trf.xlu0
        %v1803 = vpop.trf.xlu0
        %v1804 = vpop.trf.xlu0
        %v1805 = vpop.trf.xlu0
        %v1806 = vpop.trf.xlu0
        %v1807 = vpop.trf.xlu0
        %v1808 = vpop.trf.xlu0
        %v1809 = vpop.trf.xlu0
        %v1810 = vpop.trf.xlu0
        %v1811 = vpop.trf.xlu0
        %v1812 = vpop.trf.xlu0
        %v1813 = vpop.trf.xlu0
        %v1814 = vpop.trf.xlu0
        %v1815 = vmul.f32 %v1767, %v1799
        %v1816 = vmul.f32 %v1768, %v1800
        %v1817 = vmul.f32 %v1769, %v1801
        %v1818 = vmul.f32 %v1770, %v1802
        %v1819 = vmul.f32 %v1771, %v1803
        %v1820 = vmul.f32 %v1772, %v1804
        %v1821 = vmul.f32 %v1773, %v1805
        %v1822 = vmul.f32 %v1774, %v1806
        %v1823 = vmul.f32 %v1775, %v1807
        %v1824 = vmul.f32 %v1776, %v1808
        %v1825 = vmul.f32 %v1777, %v1809
        %v1826 = vmul.f32 %v1778, %v1810
        %v1827 = vmul.f32 %v1779, %v1811
        %v1828 = vmul.f32 %v1780, %v1812
        %v1829 = vmul.f32 %v1781, %v1813
        %v1830 = vmul.f32 %v1782, %v1814
        %v1831 = vadd.f32 %v1815, 1e-09
        %v1832 = vadd.f32 %v1816, 1e-09
        %v1833 = vadd.f32 %v1817, 1e-09
        %v1834 = vadd.f32 %v1818, 1e-09
        %v1835 = vadd.f32 %v1819, 1e-09
        %v1836 = vadd.f32 %v1820, 1e-09
        %v1837 = vadd.f32 %v1821, 1e-09
        %v1838 = vadd.f32 %v1822, 1e-09
        %v1839 = vadd.f32 %v1823, 1e-09
        %v1840 = vadd.f32 %v1824, 1e-09
        %v1841 = vadd.f32 %v1825, 1e-09
        %v1842 = vadd.f32 %v1826, 1e-09
        %v1843 = vadd.f32 %v1827, 1e-09
        %v1844 = vadd.f32 %v1828, 1e-09
        %v1845 = vadd.f32 %v1829, 1e-09
        %v1846 = vadd.f32 %v1830, 1e-09
        %v1847 = vrsqrt.pop %v1831
        %v1848 = vmul.f32 %v1831, %v1847
        %vm1849 = vcmp.eq.f32.partialorder %v1831, inf
        %v1850 = vsel %vm1849, %v1831, %v1848
        %vm1851 = vcmp.eq.f32.partialorder %v1831, 0.0
        %v1852 = vand.u32 %v1831, 2147483648
        %v1853 = vsel %vm1851, %v1852, %v1850
        %v1854 = vrsqrt.pop %v1832
        %v1855 = vmul.f32 %v1832, %v1854
        %vm1856 = vcmp.eq.f32.partialorder %v1832, inf
        %v1857 = vsel %vm1856, %v1832, %v1855
        %vm1858 = vcmp.eq.f32.partialorder %v1832, 0.0
        %v1859 = vand.u32 %v1832, 2147483648
        %v1860 = vsel %vm1858, %v1859, %v1857
        %v1861 = vrsqrt.pop %v1833
        %v1862 = vmul.f32 %v1833, %v1861
        %vm1863 = vcmp.eq.f32.partialorder %v1833, inf
        %v1864 = vsel %vm1863, %v1833, %v1862
        %vm1865 = vcmp.eq.f32.partialorder %v1833, 0.0
        %v1866 = vand.u32 %v1833, 2147483648
        %v1867 = vsel %vm1865, %v1866, %v1864
        %v1868 = vrsqrt.pop %v1834
        %v1869 = vmul.f32 %v1834, %v1868
        %vm1870 = vcmp.eq.f32.partialorder %v1834, inf
        %v1871 = vsel %vm1870, %v1834, %v1869
        %vm1872 = vcmp.eq.f32.partialorder %v1834, 0.0
        %v1873 = vand.u32 %v1834, 2147483648
        %v1874 = vsel %vm1872, %v1873, %v1871
        %v1875 = vrsqrt.pop %v1835
        %v1876 = vmul.f32 %v1835, %v1875
        %vm1877 = vcmp.eq.f32.partialorder %v1835, inf
        %v1878 = vsel %vm1877, %v1835, %v1876
        %vm1879 = vcmp.eq.f32.partialorder %v1835, 0.0
        %v1880 = vand.u32 %v1835, 2147483648
        %v1881 = vsel %vm1879, %v1880, %v1878
        %v1882 = vrsqrt.pop %v1836
        %v1883 = vmul.f32 %v1836, %v1882
        %vm1884 = vcmp.eq.f32.partialorder %v1836, inf
        %v1885 = vsel %vm1884, %v1836, %v1883
        %vm1886 = vcmp.eq.f32.partialorder %v1836, 0.0
        %v1887 = vand.u32 %v1836, 2147483648
        %v1888 = vsel %vm1886, %v1887, %v1885
        %v1889 = vrsqrt.pop %v1837
        %v1890 = vmul.f32 %v1837, %v1889
        %vm1891 = vcmp.eq.f32.partialorder %v1837, inf
        %v1892 = vsel %vm1891, %v1837, %v1890
        %vm1893 = vcmp.eq.f32.partialorder %v1837, 0.0
        %v1894 = vand.u32 %v1837, 2147483648
        %v1895 = vsel %vm1893, %v1894, %v1892
        %v1896 = vrsqrt.pop %v1838
        %v1897 = vmul.f32 %v1838, %v1896
        %vm1898 = vcmp.eq.f32.partialorder %v1838, inf
        %v1899 = vsel %vm1898, %v1838, %v1897
        %vm1900 = vcmp.eq.f32.partialorder %v1838, 0.0
        %v1901 = vand.u32 %v1838, 2147483648
        %v1902 = vsel %vm1900, %v1901, %v1899
        %v1903 = vrsqrt.pop %v1839
        %v1904 = vmul.f32 %v1839, %v1903
        %vm1905 = vcmp.eq.f32.partialorder %v1839, inf
        %v1906 = vsel %vm1905, %v1839, %v1904
        %vm1907 = vcmp.eq.f32.partialorder %v1839, 0.0
        %v1908 = vand.u32 %v1839, 2147483648
        %v1909 = vsel %vm1907, %v1908, %v1906
        %v1910 = vrsqrt.pop %v1840
        %v1911 = vmul.f32 %v1840, %v1910
        %vm1912 = vcmp.eq.f32.partialorder %v1840, inf
        %v1913 = vsel %vm1912, %v1840, %v1911
        %vm1914 = vcmp.eq.f32.partialorder %v1840, 0.0
        %v1915 = vand.u32 %v1840, 2147483648
        %v1916 = vsel %vm1914, %v1915, %v1913
        %v1917 = vrsqrt.pop %v1841
        %v1918 = vmul.f32 %v1841, %v1917
        %vm1919 = vcmp.eq.f32.partialorder %v1841, inf
        %v1920 = vsel %vm1919, %v1841, %v1918
        %vm1921 = vcmp.eq.f32.partialorder %v1841, 0.0
        %v1922 = vand.u32 %v1841, 2147483648
        %v1923 = vsel %vm1921, %v1922, %v1920
        %v1924 = vrsqrt.pop %v1842
        %v1925 = vmul.f32 %v1842, %v1924
        %vm1926 = vcmp.eq.f32.partialorder %v1842, inf
        %v1927 = vsel %vm1926, %v1842, %v1925
        %vm1928 = vcmp.eq.f32.partialorder %v1842, 0.0
        %v1929 = vand.u32 %v1842, 2147483648
        %v1930 = vsel %vm1928, %v1929, %v1927
        %v1931 = vrsqrt.pop %v1843
        %v1932 = vmul.f32 %v1843, %v1931
        %vm1933 = vcmp.eq.f32.partialorder %v1843, inf
        %v1934 = vsel %vm1933, %v1843, %v1932
        %vm1935 = vcmp.eq.f32.partialorder %v1843, 0.0
        %v1936 = vand.u32 %v1843, 2147483648
        %v1937 = vsel %vm1935, %v1936, %v1934
        %v1938 = vrsqrt.pop %v1844
        %v1939 = vmul.f32 %v1844, %v1938
        %vm1940 = vcmp.eq.f32.partialorder %v1844, inf
        %v1941 = vsel %vm1940, %v1844, %v1939
        %vm1942 = vcmp.eq.f32.partialorder %v1844, 0.0
        %v1943 = vand.u32 %v1844, 2147483648
        %v1944 = vsel %vm1942, %v1943, %v1941
        %v1945 = vrsqrt.pop %v1845
        %v1946 = vmul.f32 %v1845, %v1945
        %vm1947 = vcmp.eq.f32.partialorder %v1845, inf
        %v1948 = vsel %vm1947, %v1845, %v1946
        %vm1949 = vcmp.eq.f32.partialorder %v1845, 0.0
        %v1950 = vand.u32 %v1845, 2147483648
        %v1951 = vsel %vm1949, %v1950, %v1948
        %v1952 = vrsqrt.pop %v1846
        %v1953 = vmul.f32 %v1846, %v1952
        %vm1954 = vcmp.eq.f32.partialorder %v1846, inf
        %v1955 = vsel %vm1954, %v1846, %v1953
        %vm1956 = vcmp.eq.f32.partialorder %v1846, 0.0
        %v1957 = vand.u32 %v1846, 2147483648
        %v1958 = vsel %vm1956, %v1957, %v1955
        %1959 = vst [vmem:[%s351] sm:$0xff] %v1853
        %1960 = vst [vmem:[%s351 + $0x8] sm:$0xff] %v1860
        %1961 = vst [vmem:[%s351 + $0x10] sm:$0xff] %v1867
        %1962 = vst [vmem:[%s351 + $0x18] sm:$0xff] %v1874
        %1963 = vst [vmem:[%s351 + $0x20] sm:$0xff] %v1881
        %1964 = vst [vmem:[%s351 + $0x28] sm:$0xff] %v1888
        %1965 = vst [vmem:[%s351 + $0x30] sm:$0xff] %v1895
        %1966 = vst [vmem:[%s351 + $0x38] sm:$0xff] %v1902
        %1967 = vst [vmem:[%s351 + $0x40] sm:$0xff] %v1909
        %1968 = vst [vmem:[%s351 + $0x48] sm:$0xff] %v1916
        %1969 = vst [vmem:[%s351 + $0x50] sm:$0xff] %v1923
        %1970 = vst [vmem:[%s351 + $0x58] sm:$0xff] %v1930
        %1971 = vst [vmem:[%s351 + $0x60] sm:$0xff] %v1937
        %1972 = vst [vmem:[%s351 + $0x68] sm:$0xff] %v1944
        %1973 = vst [vmem:[%s351 + $0x70] sm:$0xff] %v1951
        %1974 = vst [vmem:[%s351 + $0x78] sm:$0xff] %v1958
        %v1975 = vsel %vm1446, %v1853, 0.0
        %v1976 = vsel %vm1447, %v1860, 0.0
        %v1977 = vsel %vm1448, %v1867, 0.0
        %v1978 = vsel %vm1449, %v1874, 0.0
        %v1979 = vsel %vm1450, %v1881, 0.0
        %v1980 = vsel %vm1451, %v1888, 0.0
        %v1981 = vsel %vm1452, %v1895, 0.0
        %v1982 = vsel %vm1453, %v1902, 0.0
        %v1983 = vsel %vm1454, %v1909, 0.0
        %v1984 = vsel %vm1455, %v1916, 0.0
        %v1985 = vsel %vm1456, %v1923, 0.0
        %v1986 = vsel %vm1457, %v1930, 0.0
        %v1987 = vsel %vm1458, %v1937, 0.0
        %v1988 = vsel %vm1459, %v1944, 0.0
        %v1989 = vsel %vm1460, %v1951, 0.0
        %v1990 = vsel %vm1461, %v1958, 0.0
        %v1991 = vadd.f32 %v1975, %v1976
        %v1992 = vadd.f32 %v1991, %v1977
        %v1993 = vadd.f32 %v1992, %v1978
        %v1994 = vadd.f32 %v1993, %v1979
        %v1995 = vadd.f32 %v1994, %v1980
        %v1996 = vadd.f32 %v1995, %v1981
        %v1997 = vadd.f32 %v1996, %v1982
        %v1998 = vadd.f32 %v1997, %v1983
        %v1999 = vadd.f32 %v1998, %v1984
        %v2000 = vadd.f32 %v1999, %v1985
        %v2001 = vadd.f32 %v2000, %v1986
        %v2002 = vadd.f32 %v2001, %v1987
        %v2003 = vadd.f32 %v2002, %v1988
        %v2004 = vadd.f32 %v2003, %v1989
        %v2005 = vadd.f32 %v2004, %v1990
        %v2006 = vrot.slane %v2005, 4
        %v2007 = vadd.f32 %v2005, %v2006
        %v2008 = vrot.slane %v2007, 2
        %v2009 = vadd.f32 %v2007, %v2008
        %v2010 = vrot.slane %v2009, 1
        %v2011 = vadd.f32 %v2009, %v2010
        %v2012 = vsel %vm1462, %v1853, 0.0
        %v2013 = vsel %vm1463, %v1860, 0.0
        %v2014 = vsel %vm1464, %v1867, 0.0
        %v2015 = vsel %vm1465, %v1874, 0.0
        %v2016 = vsel %vm1466, %v1881, 0.0
        %v2017 = vsel %vm1467, %v1888, 0.0
        %v2018 = vsel %vm1468, %v1895, 0.0
        %v2019 = vsel %vm1469, %v1902, 0.0
        %v2020 = vsel %vm1470, %v1909, 0.0
        %v2021 = vsel %vm1471, %v1916, 0.0
        %v2022 = vsel %vm1472, %v1923, 0.0
        %v2023 = vsel %vm1473, %v1930, 0.0
        %v2024 = vsel %vm1474, %v1937, 0.0
        %v2025 = vsel %vm1475, %v1944, 0.0
        %v2026 = vsel %vm1476, %v1951, 0.0
        %v2027 = vsel %vm1477, %v1958, 0.0
        %2028 = vadd.xlane.f32.xlu0 %v2012
        %v2029 = vpop.xlane.xlu0 %2028
        %2030 = vadd.xlane.f32.xlu0 %v2013
        %v2031 = vpop.xlane.xlu0 %2030
        %2032 = vadd.xlane.f32.xlu0 %v2014
        %v2033 = vpop.xlane.xlu0 %2032
        %2034 = vadd.xlane.f32.xlu0 %v2015
        %v2035 = vpop.xlane.xlu0 %2034
        %2036 = vadd.xlane.f32.xlu0 %v2016
        %v2037 = vpop.xlane.xlu0 %2036
        %2038 = vadd.xlane.f32.xlu0 %v2017
        %v2039 = vpop.xlane.xlu0 %2038
        %2040 = vadd.xlane.f32.xlu0 %v2018
        %v2041 = vpop.xlane.xlu0 %2040
        %2042 = vadd.xlane.f32.xlu0 %v2019
        %v2043 = vpop.xlane.xlu0 %2042
        %2044 = vadd.xlane.f32.xlu0 %v2020
        %v2045 = vpop.xlane.xlu0 %2044
        %2046 = vadd.xlane.f32.xlu0 %v2021
        %v2047 = vpop.xlane.xlu0 %2046
        %2048 = vadd.xlane.f32.xlu0 %v2022
        %v2049 = vpop.xlane.xlu0 %2048
        %2050 = vadd.xlane.f32.xlu0 %v2023
        %v2051 = vpop.xlane.xlu0 %2050
        %2052 = vadd.xlane.f32.xlu0 %v2024
        %v2053 = vpop.xlane.xlu0 %2052
        %2054 = vadd.xlane.f32.xlu0 %v2025
        %v2055 = vpop.xlane.xlu0 %2054
        %2056 = vadd.xlane.f32.xlu0 %v2026
        %v2057 = vpop.xlane.xlu0 %2056
        %2058 = vadd.xlane.f32.xlu0 %v2027
        %v2059 = vpop.xlane.xlu0 %2058
        %vm2060 = vcmp.ge.s32.totalorder %v1397, 1
        %v2061 = vadd.f32 %v2011, 1e-09
        %v2062 = vlog2.pop %v2061
        %v2063 = vmul.f32 %v2062, 0.6931472
        %v2064 = vsel %vm2060, %v2063, 0.0
        %vm2065 = vcmp.ge.s32.totalorder %v1380, 1
        %vm2066 = vcmp.ge.s32.totalorder %v1381, 1
        %vm2067 = vcmp.ge.s32.totalorder %v1382, 1
        %vm2068 = vcmp.ge.s32.totalorder %v1383, 1
        %vm2069 = vcmp.ge.s32.totalorder %v1384, 1
        %vm2070 = vcmp.ge.s32.totalorder %v1385, 1
        %vm2071 = vcmp.ge.s32.totalorder %v1386, 1
        %vm2072 = vcmp.ge.s32.totalorder %v1387, 1
        %vm2073 = vcmp.ge.s32.totalorder %v1388, 1
        %vm2074 = vcmp.ge.s32.totalorder %v1389, 1
        %vm2075 = vcmp.ge.s32.totalorder %v1390, 1
        %vm2076 = vcmp.ge.s32.totalorder %v1391, 1
        %vm2077 = vcmp.ge.s32.totalorder %v1392, 1
        %vm2078 = vcmp.ge.s32.totalorder %v1393, 1
        %vm2079 = vcmp.ge.s32.totalorder %v1394, 1
        %vm2080 = vcmp.ge.s32.totalorder %v1395, 1
        %v2081 = vadd.f32 %v2029, 1e-09
        %v2082 = vadd.f32 %v2031, 1e-09
        %v2083 = vadd.f32 %v2033, 1e-09
        %v2084 = vadd.f32 %v2035, 1e-09
        %v2085 = vadd.f32 %v2037, 1e-09
        %v2086 = vadd.f32 %v2039, 1e-09
        %v2087 = vadd.f32 %v2041, 1e-09
        %v2088 = vadd.f32 %v2043, 1e-09
        %v2089 = vadd.f32 %v2045, 1e-09
        %v2090 = vadd.f32 %v2047, 1e-09
        %v2091 = vadd.f32 %v2049, 1e-09
        %v2092 = vadd.f32 %v2051, 1e-09
        %v2093 = vadd.f32 %v2053, 1e-09
        %v2094 = vadd.f32 %v2055, 1e-09
        %v2095 = vadd.f32 %v2057, 1e-09
        %v2096 = vadd.f32 %v2059, 1e-09
        %v2097 = vlog2.pop %v2081
        %v2098 = vmul.f32 %v2097, 0.6931472
        %v2099 = vlog2.pop %v2082
        %v2100 = vmul.f32 %v2099, 0.6931472
        %v2101 = vlog2.pop %v2083
        %v2102 = vmul.f32 %v2101, 0.6931472
        %v2103 = vlog2.pop %v2084
        %v2104 = vmul.f32 %v2103, 0.6931472
        %v2105 = vlog2.pop %v2085
        %v2106 = vmul.f32 %v2105, 0.6931472
        %v2107 = vlog2.pop %v2086
        %v2108 = vmul.f32 %v2107, 0.6931472
        %v2109 = vlog2.pop %v2087
        %v2110 = vmul.f32 %v2109, 0.6931472
        %v2111 = vlog2.pop %v2088
        %v2112 = vmul.f32 %v2111, 0.6931472
        %v2113 = vlog2.pop %v2089
        %v2114 = vmul.f32 %v2113, 0.6931472
        %v2115 = vlog2.pop %v2090
        %v2116 = vmul.f32 %v2115, 0.6931472
        %v2117 = vlog2.pop %v2091
        %v2118 = vmul.f32 %v2117, 0.6931472
        %v2119 = vlog2.pop %v2092
        %v2120 = vmul.f32 %v2119, 0.6931472
        %v2121 = vlog2.pop %v2093
        %v2122 = vmul.f32 %v2121, 0.6931472
        %v2123 = vlog2.pop %v2094
        %v2124 = vmul.f32 %v2123, 0.6931472
        %v2125 = vlog2.pop %v2095
        %v2126 = vmul.f32 %v2125, 0.6931472
        %v2127 = vlog2.pop %v2096
        %v2128 = vmul.f32 %v2127, 0.6931472
        %v2129 = vsel %vm2065, %v2098, 0.0
        %v2130 = vsel %vm2066, %v2100, 0.0
        %v2131 = vsel %vm2067, %v2102, 0.0
        %v2132 = vsel %vm2068, %v2104, 0.0
        %v2133 = vsel %vm2069, %v2106, 0.0
        %v2134 = vsel %vm2070, %v2108, 0.0
        %v2135 = vsel %vm2071, %v2110, 0.0
        %v2136 = vsel %vm2072, %v2112, 0.0
        %v2137 = vsel %vm2073, %v2114, 0.0
        %v2138 = vsel %vm2074, %v2116, 0.0
        %v2139 = vsel %vm2075, %v2118, 0.0
        %v2140 = vsel %vm2076, %v2120, 0.0
        %v2141 = vsel %vm2077, %v2122, 0.0
        %v2142 = vsel %vm2078, %v2124, 0.0
        %v2143 = vsel %vm2079, %v2126, 0.0
        %v2144 = vsel %vm2080, %v2128, 0.0
        %vm2145 = vcmp.le.s32.totalorder %v1398, 0
        %vm2146 = vcmp.le.s32.totalorder %v1399, 0
        %vm2147 = vcmp.le.s32.totalorder %v1400, 0
        %vm2148 = vcmp.le.s32.totalorder %v1401, 0
        %vm2149 = vcmp.le.s32.totalorder %v1402, 0
        %vm2150 = vcmp.le.s32.totalorder %v1403, 0
        %vm2151 = vcmp.le.s32.totalorder %v1404, 0
        %vm2152 = vcmp.le.s32.totalorder %v1405, 0
        %vm2153 = vcmp.le.s32.totalorder %v1406, 0
        %vm2154 = vcmp.le.s32.totalorder %v1407, 0
        %vm2155 = vcmp.le.s32.totalorder %v1408, 0
        %vm2156 = vcmp.le.s32.totalorder %v1409, 0
        %vm2157 = vcmp.le.s32.totalorder %v1410, 0
        %vm2158 = vcmp.le.s32.totalorder %v1411, 0
        %vm2159 = vcmp.le.s32.totalorder %v1412, 0
        %vm2160 = vcmp.le.s32.totalorder %v1413, 0
        %v2161 = vsel %vm2145, %v2064, 0.0
        %v2162 = vsel %vm2146, %v2064, 0.0
        %v2163 = vsel %vm2147, %v2064, 0.0
        %v2164 = vsel %vm2148, %v2064, 0.0
        %v2165 = vsel %vm2149, %v2064, 0.0
        %v2166 = vsel %vm2150, %v2064, 0.0
        %v2167 = vsel %vm2151, %v2064, 0.0
        %v2168 = vsel %vm2152, %v2064, 0.0
        %v2169 = vsel %vm2153, %v2064, 0.0
        %v2170 = vsel %vm2154, %v2064, 0.0
        %v2171 = vsel %vm2155, %v2064, 0.0
        %v2172 = vsel %vm2156, %v2064, 0.0
        %v2173 = vsel %vm2157, %v2064, 0.0
        %v2174 = vsel %vm2158, %v2064, 0.0
        %v2175 = vsel %vm2159, %v2064, 0.0
        %v2176 = vsel %vm2160, %v2064, 0.0
        %2177 = vadd.xlane.f32.xlu0 %v2161
        %v2178 = vpop.xlane.xlu0 %2177
        %2179 = vadd.xlane.f32.xlu0 %v2162
        %v2180 = vpop.xlane.xlu0 %2179
        %2181 = vadd.xlane.f32.xlu0 %v2163
        %v2182 = vpop.xlane.xlu0 %2181
        %2183 = vadd.xlane.f32.xlu0 %v2164
        %v2184 = vpop.xlane.xlu0 %2183
        %2185 = vadd.xlane.f32.xlu0 %v2165
        %v2186 = vpop.xlane.xlu0 %2185
        %2187 = vadd.xlane.f32.xlu0 %v2166
        %v2188 = vpop.xlane.xlu0 %2187
        %2189 = vadd.xlane.f32.xlu0 %v2167
        %v2190 = vpop.xlane.xlu0 %2189
        %2191 = vadd.xlane.f32.xlu0 %v2168
        %v2192 = vpop.xlane.xlu0 %2191
        %2193 = vadd.xlane.f32.xlu0 %v2169
        %v2194 = vpop.xlane.xlu0 %2193
        %2195 = vadd.xlane.f32.xlu0 %v2170
        %v2196 = vpop.xlane.xlu0 %2195
        %2197 = vadd.xlane.f32.xlu0 %v2171
        %v2198 = vpop.xlane.xlu0 %2197
        %2199 = vadd.xlane.f32.xlu0 %v2172
        %v2200 = vpop.xlane.xlu0 %2199
        %2201 = vadd.xlane.f32.xlu0 %v2173
        %v2202 = vpop.xlane.xlu0 %2201
        %2203 = vadd.xlane.f32.xlu0 %v2174
        %v2204 = vpop.xlane.xlu0 %2203
        %2205 = vadd.xlane.f32.xlu0 %v2175
        %v2206 = vpop.xlane.xlu0 %2205
        %2207 = vadd.xlane.f32.xlu0 %v2176
        %v2208 = vpop.xlane.xlu0 %2207
        %vm2209 = vcmp.ge.s32.totalorder %v1398, 0
        %vm2210 = vcmp.ge.s32.totalorder %v1399, 0
        %vm2211 = vcmp.ge.s32.totalorder %v1400, 0
        %vm2212 = vcmp.ge.s32.totalorder %v1401, 0
        %vm2213 = vcmp.ge.s32.totalorder %v1402, 0
        %vm2214 = vcmp.ge.s32.totalorder %v1403, 0
        %vm2215 = vcmp.ge.s32.totalorder %v1404, 0
        %vm2216 = vcmp.ge.s32.totalorder %v1405, 0
        %vm2217 = vcmp.ge.s32.totalorder %v1406, 0
        %vm2218 = vcmp.ge.s32.totalorder %v1407, 0
        %vm2219 = vcmp.ge.s32.totalorder %v1408, 0
        %vm2220 = vcmp.ge.s32.totalorder %v1409, 0
        %vm2221 = vcmp.ge.s32.totalorder %v1410, 0
        %vm2222 = vcmp.ge.s32.totalorder %v1411, 0
        %vm2223 = vcmp.ge.s32.totalorder %v1412, 0
        %vm2224 = vcmp.ge.s32.totalorder %v1413, 0
        %v2225 = vsel %vm2209, %v2129, 0.0
        %v2226 = vsel %vm2210, %v2130, 0.0
        %v2227 = vsel %vm2211, %v2131, 0.0
        %v2228 = vsel %vm2212, %v2132, 0.0
        %v2229 = vsel %vm2213, %v2133, 0.0
        %v2230 = vsel %vm2214, %v2134, 0.0
        %v2231 = vsel %vm2215, %v2135, 0.0
        %v2232 = vsel %vm2216, %v2136, 0.0
        %v2233 = vsel %vm2217, %v2137, 0.0
        %v2234 = vsel %vm2218, %v2138, 0.0
        %v2235 = vsel %vm2219, %v2139, 0.0
        %v2236 = vsel %vm2220, %v2140, 0.0
        %v2237 = vsel %vm2221, %v2141, 0.0
        %v2238 = vsel %vm2222, %v2142, 0.0
        %v2239 = vsel %vm2223, %v2143, 0.0
        %v2240 = vsel %vm2224, %v2144, 0.0
        %v2241 = vadd.f32 %v2225, %v2226
        %v2242 = vadd.f32 %v2241, %v2227
        %v2243 = vadd.f32 %v2242, %v2228
        %v2244 = vadd.f32 %v2243, %v2229
        %v2245 = vadd.f32 %v2244, %v2230
        %v2246 = vadd.f32 %v2245, %v2231
        %v2247 = vadd.f32 %v2246, %v2232
        %v2248 = vadd.f32 %v2247, %v2233
        %v2249 = vadd.f32 %v2248, %v2234
        %v2250 = vadd.f32 %v2249, %v2235
        %v2251 = vadd.f32 %v2250, %v2236
        %v2252 = vadd.f32 %v2251, %v2237
        %v2253 = vadd.f32 %v2252, %v2238
        %v2254 = vadd.f32 %v2253, %v2239
        %v2255 = vadd.f32 %v2254, %v2240
        %v2256 = vrot.slane %v2255, 4
        %v2257 = vadd.f32 %v2255, %v2256
        %v2258 = vrot.slane %v2257, 2
        %v2259 = vadd.f32 %v2257, %v2258
        %v2260 = vrot.slane %v2259, 1
        %v2261 = vadd.f32 %v2259, %v2260
        %v2262 = vsub.f32 %v2261, %v2178
        %v2263 = vsub.f32 %v2261, %v2180
        %v2264 = vsub.f32 %v2261, %v2182
        %v2265 = vsub.f32 %v2261, %v2184
        %v2266 = vsub.f32 %v2261, %v2186
        %v2267 = vsub.f32 %v2261, %v2188
        %v2268 = vsub.f32 %v2261, %v2190
        %v2269 = vsub.f32 %v2261, %v2192
        %v2270 = vsub.f32 %v2261, %v2194
        %v2271 = vsub.f32 %v2261, %v2196
        %v2272 = vsub.f32 %v2261, %v2198
        %v2273 = vsub.f32 %v2261, %v2200
        %v2274 = vsub.f32 %v2261, %v2202
        %v2275 = vsub.f32 %v2261, %v2204
        %v2276 = vsub.f32 %v2261, %v2206
        %v2277 = vsub.f32 %v2261, %v2208
        %vm2278 = vcmp.gt.s32.totalorder %v1398, 0
        %vm2279 = vcmp.gt.s32.totalorder %v1399, 0
        %vm2280 = vcmp.gt.s32.totalorder %v1400, 0
        %vm2281 = vcmp.gt.s32.totalorder %v1401, 0
        %vm2282 = vcmp.gt.s32.totalorder %v1402, 0
        %vm2283 = vcmp.gt.s32.totalorder %v1403, 0
        %vm2284 = vcmp.gt.s32.totalorder %v1404, 0
        %vm2285 = vcmp.gt.s32.totalorder %v1405, 0
        %vm2286 = vcmp.gt.s32.totalorder %v1406, 0
        %vm2287 = vcmp.gt.s32.totalorder %v1407, 0
        %vm2288 = vcmp.gt.s32.totalorder %v1408, 0
        %vm2289 = vcmp.gt.s32.totalorder %v1409, 0
        %vm2290 = vcmp.gt.s32.totalorder %v1410, 0
        %vm2291 = vcmp.gt.s32.totalorder %v1411, 0
        %vm2292 = vcmp.gt.s32.totalorder %v1412, 0
        %vm2293 = vcmp.gt.s32.totalorder %v1413, 0
        %v2294 = vsub.f32 0.0, %v2262
        %v2295 = vsub.f32 0.0, %v2263
        %v2296 = vsub.f32 0.0, %v2264
        %v2297 = vsub.f32 0.0, %v2265
        %v2298 = vsub.f32 0.0, %v2266
        %v2299 = vsub.f32 0.0, %v2267
        %v2300 = vsub.f32 0.0, %v2268
        %v2301 = vsub.f32 0.0, %v2269
        %v2302 = vsub.f32 0.0, %v2270
        %v2303 = vsub.f32 0.0, %v2271
        %v2304 = vsub.f32 0.0, %v2272
        %v2305 = vsub.f32 0.0, %v2273
        %v2306 = vsub.f32 0.0, %v2274
        %v2307 = vsub.f32 0.0, %v2275
        %v2308 = vsub.f32 0.0, %v2276
        %v2309 = vsub.f32 0.0, %v2277
        %v2310 = vsel %vm2278, %v2262, %v2294
        %v2311 = vsel %vm2279, %v2263, %v2295
        %v2312 = vsel %vm2280, %v2264, %v2296
        %v2313 = vsel %vm2281, %v2265, %v2297
        %v2314 = vsel %vm2282, %v2266, %v2298
        %v2315 = vsel %vm2283, %v2267, %v2299
        %v2316 = vsel %vm2284, %v2268, %v2300
        %v2317 = vsel %vm2285, %v2269, %v2301
        %v2318 = vsel %vm2286, %v2270, %v2302
        %v2319 = vsel %vm2287, %v2271, %v2303
        %v2320 = vsel %vm2288, %v2272, %v2304
        %v2321 = vsel %vm2289, %v2273, %v2305
        %v2322 = vsel %vm2290, %v2274, %v2306
        %v2323 = vsel %vm2291, %v2275, %v2307
        %v2324 = vsel %vm2292, %v2276, %v2308
        %v2325 = vsel %vm2293, %v2277, %v2309
        %v2326 = vmul.f32 %v2310, 1.442695
        %v2327 = vpow.pop %v2326
        %v2328 = vmul.f32 %v2311, 1.442695
        %v2329 = vpow.pop %v2328
        %v2330 = vmul.f32 %v2312, 1.442695
        %v2331 = vpow.pop %v2330
        %v2332 = vmul.f32 %v2313, 1.442695
        %v2333 = vpow.pop %v2332
        %v2334 = vmul.f32 %v2314, 1.442695
        %v2335 = vpow.pop %v2334
        %v2336 = vmul.f32 %v2315, 1.442695
        %v2337 = vpow.pop %v2336
        %v2338 = vmul.f32 %v2316, 1.442695
        %v2339 = vpow.pop %v2338
        %v2340 = vmul.f32 %v2317, 1.442695
        %v2341 = vpow.pop %v2340
        %v2342 = vmul.f32 %v2318, 1.442695
        %v2343 = vpow.pop %v2342
        %v2344 = vmul.f32 %v2319, 1.442695
        %v2345 = vpow.pop %v2344
        %v2346 = vmul.f32 %v2320, 1.442695
        %v2347 = vpow.pop %v2346
        %v2348 = vmul.f32 %v2321, 1.442695
        %v2349 = vpow.pop %v2348
        %v2350 = vmul.f32 %v2322, 1.442695
        %v2351 = vpow.pop %v2350
        %v2352 = vmul.f32 %v2323, 1.442695
        %v2353 = vpow.pop %v2352
        %v2354 = vmul.f32 %v2324, 1.442695
        %v2355 = vpow.pop %v2354
        %v2356 = vmul.f32 %v2325, 1.442695
        %v2357 = vpow.pop %v2356
        %v2358 = vadd.f32 %v2327, 1e-09
        %v2359 = vadd.f32 %v2329, 1e-09
        %v2360 = vadd.f32 %v2331, 1e-09
        %v2361 = vadd.f32 %v2333, 1e-09
        %v2362 = vadd.f32 %v2335, 1e-09
        %v2363 = vadd.f32 %v2337, 1e-09
        %v2364 = vadd.f32 %v2339, 1e-09
        %v2365 = vadd.f32 %v2341, 1e-09
        %v2366 = vadd.f32 %v2343, 1e-09
        %v2367 = vadd.f32 %v2345, 1e-09
        %v2368 = vadd.f32 %v2347, 1e-09
        %v2369 = vadd.f32 %v2349, 1e-09
        %v2370 = vadd.f32 %v2351, 1e-09
        %v2371 = vadd.f32 %v2353, 1e-09
        %v2372 = vadd.f32 %v2355, 1e-09
        %v2373 = vadd.f32 %v2357, 1e-09
        %vm2374 = vcmp.eq.s32.totalorder %v1398, 0
        %vm2375 = vcmp.eq.s32.totalorder %v1399, 0
        %vm2376 = vcmp.eq.s32.totalorder %v1400, 0
        %vm2377 = vcmp.eq.s32.totalorder %v1401, 0
        %vm2378 = vcmp.eq.s32.totalorder %v1402, 0
        %vm2379 = vcmp.eq.s32.totalorder %v1403, 0
        %vm2380 = vcmp.eq.s32.totalorder %v1404, 0
        %vm2381 = vcmp.eq.s32.totalorder %v1405, 0
        %vm2382 = vcmp.eq.s32.totalorder %v1406, 0
        %vm2383 = vcmp.eq.s32.totalorder %v1407, 0
        %vm2384 = vcmp.eq.s32.totalorder %v1408, 0
        %vm2385 = vcmp.eq.s32.totalorder %v1409, 0
        %vm2386 = vcmp.eq.s32.totalorder %v1410, 0
        %vm2387 = vcmp.eq.s32.totalorder %v1411, 0
        %vm2388 = vcmp.eq.s32.totalorder %v1412, 0
        %vm2389 = vcmp.eq.s32.totalorder %v1413, 0
        %v2390 = vsel %vm2374, %v1853, %v2358
        %v2391 = vsel %vm2375, %v1860, %v2359
        %v2392 = vsel %vm2376, %v1867, %v2360
        %v2393 = vsel %vm2377, %v1874, %v2361
        %v2394 = vsel %vm2378, %v1881, %v2362
        %v2395 = vsel %vm2379, %v1888, %v2363
        %v2396 = vsel %vm2380, %v1895, %v2364
        %v2397 = vsel %vm2381, %v1902, %v2365
        %v2398 = vsel %vm2382, %v1909, %v2366
        %v2399 = vsel %vm2383, %v1916, %v2367
        %v2400 = vsel %vm2384, %v1923, %v2368
        %v2401 = vsel %vm2385, %v1930, %v2369
        %v2402 = vsel %vm2386, %v1937, %v2370
        %v2403 = vsel %vm2387, %v1944, %v2371
        %v2404 = vsel %vm2388, %v1951, %v2372
        %v2405 = vsel %vm2389, %v1958, %v2373
        %2406 = vst [vmem:[%s344] sm:$0xff] %v2390
        %2407 = vst [vmem:[%s344 + $0x8] sm:$0xff] %v2391
        %2408 = vst [vmem:[%s344 + $0x10] sm:$0xff] %v2392
        %2409 = vst [vmem:[%s344 + $0x18] sm:$0xff] %v2393
        %2410 = vst [vmem:[%s344 + $0x20] sm:$0xff] %v2394
        %2411 = vst [vmem:[%s344 + $0x28] sm:$0xff] %v2395
        %2412 = vst [vmem:[%s344 + $0x30] sm:$0xff] %v2396
        %2413 = vst [vmem:[%s344 + $0x38] sm:$0xff] %v2397
        %2414 = vst [vmem:[%s344 + $0x40] sm:$0xff] %v2398
        %2415 = vst [vmem:[%s344 + $0x48] sm:$0xff] %v2399
        %2416 = vst [vmem:[%s344 + $0x50] sm:$0xff] %v2400
        %2417 = vst [vmem:[%s344 + $0x58] sm:$0xff] %v2401
        %2418 = vst [vmem:[%s344 + $0x60] sm:$0xff] %v2402
        %2419 = vst [vmem:[%s344 + $0x68] sm:$0xff] %v2403
        %2420 = vst [vmem:[%s344 + $0x70] sm:$0xff] %v2404
        %2421 = vst [vmem:[%s344 + $0x78] sm:$0xff] %v2405
        %s2422 = sand.u32 %s213, 1
        %s2423 = scalar_lea.sflag [#allocation3], %s2422
        %s2424 = sand.u32 %s213, 1
        %s2425 = smul.addr %s2424, 128
        %s2426 = scalar_lea.vmem [#allocation2], %s2425
        %s2427 = sand.u32 %s239, 1
        %s2428 = scalar_lea.sflag [#allocation5], %s2427
        %s2429 = sand.u32 %s239, 1
        %s2430 = smul.addr %s2429, 128
        %s2431 = scalar_lea.vmem [#allocation4], %s2430
        // Predicated region
        $region53: #{tpu_custom_call.1} parent=51 // pred_check
          %p2432 = pneg %p223
        $region54: #{tpu_custom_call.1} parent=51 // pred_check_branch
          %2434 = sbr.rel (%p2432) target = $region56
        $region55: #{tpu_custom_call.1} parent=51 // pred_region
          %s2436 = ssub.s32 2048, 2048
          %2437 = vsyncadd %s2423, %s2436
          %s2438 = smul.addr %s27, 16
          %s2439 = smul.addr %s2438, 128
          %s2440 = scalar_lea.hbm %s8, %s2439
          %s2441 = sshll.u32 %s2426, 4
          %s2442 = int_to_ptr.vmem [resolvable:$true] %s2441
          %2447 = dma.vmem_to_hbm [thread:$0]  %s2442, 2048, %s2440, %s2423, 128, 128, 8
        $region56: #{tpu_custom_call.1} parent=51 // pred_fallthru
          _
        // Predicated region
        $region57: #{tpu_custom_call.1} parent=51 // pred_check
          %p2448 = pneg %p249
        $region58: #{tpu_custom_call.1} parent=51 // pred_check_branch
          %2450 = sbr.rel (%p2448) target = $region60
        $region59: #{tpu_custom_call.1} parent=51 // pred_region
          %s2452 = ssub.s32 2048, 2048
          %2453 = vsyncadd %s2428, %s2452
          %s2454 = smul.addr %s27, 16
          %s2455 = smul.addr %s2454, 128
          %s2456 = scalar_lea.hbm %s9, %s2455
          %s2457 = sshll.u32 %s2431, 4
          %s2458 = int_to_ptr.vmem [resolvable:$true] %s2457
          %2463 = dma.vmem_to_hbm [thread:$0]  %s2458, 2048, %s2456, %s2428, 128, 128, 8
        $region60: #{tpu_custom_call.1} parent=51 // pred_fallthru
          _
      $region52: #{tpu_custom_call.1} parent=5 // pred_fallthru
        _
      %p2464 = scmp.le.s32.totalorder 2, %s22
      // Predicated region
      $region61: #{tpu_custom_call.1} parent=5 // pred_check
        %p2465 = pneg %p2464
      $region62: #{tpu_custom_call.1} parent=5 // pred_check_branch
        %2467 = sbr.rel (%p2465) target = $region64
      $region63: #{tpu_custom_call.1} parent=5 // pred_region
        %s2468 = ssub.s32 %s22, 2
        // Predicated region
        $region65: #{tpu_custom_call.1} parent=63 // pred_check
          %p2469 = pneg %p229
        $region66: #{tpu_custom_call.1} parent=63 // pred_check_branch
          %2471 = sbr.rel (%p2469) target = $region68
        $region67: #{tpu_custom_call.1} parent=63 // pred_region
          %s2472 = sand.u32 %s214, 1
          %s2473 = scalar_lea.sflag [#allocation3], %s2472
          %s2474 = sand.u32 %s214, 1
          %s2475 = smul.addr %s2474, 128
          %s2476 = scalar_lea.vmem [#allocation2], %s2475
          %2477 = dma.done %s2473, 2048
        $region68: #{tpu_custom_call.1} parent=63 // pred_fallthru
          _
        // Predicated region
        $region69: #{tpu_custom_call.1} parent=63 // pred_check
          %p2478 = pneg %p255
        $region70: #{tpu_custom_call.1} parent=63 // pred_check_branch
          %2480 = sbr.rel (%p2478) target = $region72
        $region71: #{tpu_custom_call.1} parent=63 // pred_region
          %s2481 = sand.u32 %s240, 1
          %s2482 = scalar_lea.sflag [#allocation5], %s2481
          %s2483 = sand.u32 %s240, 1
          %s2484 = smul.addr %s2483, 128
          %s2485 = scalar_lea.vmem [#allocation4], %s2484
          %2486 = dma.done %s2482, 2048
        $region72: #{tpu_custom_call.1} parent=63 // pred_fallthru
          _
      $region64: #{tpu_custom_call.1} parent=5 // pred_fallthru
        _
    $region6: #{tpu_custom_call.1} parent=1 // loop_footer
      %s26 = sadd.s32 1, %s22
    $region7: #{tpu_custom_call.1} parent=1 // loop_footer_branch
      %21 = sbr.rel target = $region3
    $region8: #{tpu_custom_call.1} parent=1 // loop_exit
      _
    %2487 = vsyncpa [#allocation3], 1
    %s2488 = scalar_lea.sflag [#allocation3], 1
    %2489 = vsyncpa %s2488, 1
    %2490 = vsyncpa [#allocation5], 1
    %s2491 = scalar_lea.sflag [#allocation5], 1
    %2492 = vsyncpa %s2491, 1

</llo_original>
